<compile_context>
chip_gen: v6e
topology: v6e:2x2x1
jax: 0.10.0
libtpu: 0.0.40
codegen_flags: <defaults>
</compile_context>

<pallas_src>
import jax
import jax.numpy as jnp
from jax.experimental import pallas as pl
from jax.experimental.pallas import tpu as pltpu

INPUT_SIZE = 4
HIDDEN_SIZE = 32
SEQ_LEN = 8
BATCH = 2          # note: up to B=8 sequences ride in the same f32 sublanes for free

# n_qubits per gate, mirroring PeepholeQLSTM.__init__
GATES = ("input", "forget", "candidate", "output")
N_QUBITS = {"input": 4, "forget": 5, "candidate": 4, "output": 3}
NQ_PAD = 8         # pad each gate's tiny qubit dim to 8 (zero-padded -> exact)
QDIM = NQ_PAD * len(GATES)          # 32 fused qin features
ZDIM = HIDDEN_SIZE * len(GATES)     # 128 fused gate pre-activations (one full vreg)


def _sigmoid(z):
    # tanh-form sigmoid: single EUP tanh pass, no divide on the serial chain.
    return 0.5 * (jnp.tanh(0.5 * z) + 1.0)


def peephole_qlstm_kernel(x_ref, wc_ref, wx_ref, b_in_ref, wout_ref, b_out_ref,
                          hseq_ref, h_out_ref, c_out_ref):
    T, B, H = hseq_ref.shape

    # Hoist all weight/bias reads out of the (unrolled) time loop.
    wc = wc_ref[...]          # (H, 32)   fused qin weights, c half
    wout = wout_ref[...]      # (32, 128) block-diagonal fused qout weights
    b_out = b_out_ref[...]    # (1, 128)

    # x-dependent half of qin does not depend on the recurrence: one matmul.
    xp = (jnp.dot(x_ref[...], wx_ref[...], preferred_element_type=jnp.float32)
          + b_in_ref[...])    # (T*B, 32)

    c_t = jnp.zeros((B, H), jnp.float32)
    h_t = jnp.zeros((B, H), jnp.float32)

    for t in range(T):  # T static -> fully unrolled for scheduler visibility
        # Fused qin for all four gates: only c_t @ WC_all is on the serial path.
        q_all = xp[t * B:(t + 1) * B, :] + jnp.dot(
            c_t, wc, preferred_element_type=jnp.float32)                 # (B, 32)
        # TODO(synk): quantum circuit expectation not classically specified;
        # identity passthrough on q_all.
        # Fused qout: lane-dense (B, 128) = [i | f | g | o] pre-activations.
        z_all = jnp.dot(q_all, wout,
                        preferred_element_type=jnp.float32) + b_out      # (B, 128)

        s_all = _sigmoid(z_all)     # one pass covers i, f, o
        t_all = jnp.tanh(z_all)     # one pass covers g

        i_t = s_all[:, 0 * H:1 * H]
        f_t = s_all[:, 1 * H:2 * H]
        g_t = t_all[:, 2 * H:3 * H]
        o_t = s_all[:, 3 * H:4 * H]   # output gate uses pre-update c (as in source)

        c_t = f_t * c_t + i_t * g_t
        h_t = o_t * jnp.tanh(c_t)
        hseq_ref[t] = h_t

    h_out_ref[0] = h_t
    c_out_ref[0] = c_t


def peephole_qlstm(inputs, params):
    T, B, I = inputs.shape
    H = HIDDEN_SIZE
    x2 = inputs.reshape(T * B, I)   # layout plumbing only (lets the kernel do one qin matmul)

    vmem = lambda: pl.BlockSpec(memory_space=pltpu.MemorySpace.VMEM)
    out_shapes = (
        jax.ShapeDtypeStruct((T, B, H), jnp.float32),   # hidden_sequence
        jax.ShapeDtypeStruct((1, B, H), jnp.float32),   # h_t
        jax.ShapeDtypeStruct((1, B, H), jnp.float32),   # c_t
    )
    return pl.pallas_call(
        peephole_qlstm_kernel,
        out_shape=out_shapes,
        in_specs=[vmem() for _ in range(6)],
        out_specs=tuple(vmem() for _ in range(3)),
    )(x2, params["wc"], params["wx"], params["b_in"], params["w_out"],
      params["b_out"])


def _linear_init(key, fan_in, fan_out):
    """PyTorch nn.Linear default init: U(-1/sqrt(fan_in), 1/sqrt(fan_in))."""
    kw, kb = jax.random.split(key)
    bound = 1.0 / float(fan_in) ** 0.5
    w = jax.random.uniform(kw, (fan_out, fan_in), jnp.float32, -bound, bound)
    b = jax.random.uniform(kb, (fan_out,), jnp.float32, -bound, bound)
    return w, b


def init_params(key, input_size=INPUT_SIZE, hidden_size=HIDDEN_SIZE):
    """Pack the 4 gates' (qin, qout) Linears into fused, zero-padded operands.

    For each gate g with n_qubits nq:
      qin  W_in (nq, H+I) is split into a c-half and an x-half, transposed, and
           placed into columns [g*8, g*8+nq) of WC_all (H,32) / WX_all (I,32).
      qout W_out (H, nq) is transposed into the block-diagonal slot
           [g*8:g*8+nq, g*H:(g+1)*H) of W_out_all (32, 128).
    Zero-padded qubit columns feed only zero rows of W_out_all, so the fusion
    is exactly equivalent to the per-gate formulation.
    """
    H, I = hidden_size, input_size
    wc_all = jnp.zeros((H, QDIM), jnp.float32)
    wx_all = jnp.zeros((I, QDIM), jnp.float32)
    b_in_all = jnp.zeros((1, QDIM), jnp.float32)
    wout_all = jnp.zeros((QDIM, len(GATES) * H), jnp.float32)
    b_out_all = jnp.zeros((1, len(GATES) * H), jnp.float32)

    for g, gate in enumerate(GATES):
        nq = N_QUBITS[gate]
        key, k1, k2 = jax.random.split(key, 3)
        w_in, b_in = _linear_init(k1, I + H, nq)    # (nq, H+I), (nq,)
        w_out, b_out = _linear_init(k2, nq, H)      # (H, nq),   (H,)

        w_in_t = w_in.T                             # (H+I, nq): rows [c | x]
        col = g * NQ_PAD
        wc_all = wc_all.at[:, col:col + nq].set(w_in_t[:H])
        wx_all = wx_all.at[:, col:col + nq].set(w_in_t[H:])
        b_in_all = b_in_all.at[0, col:col + nq].set(b_in)
        wout_all = wout_all.at[col:col + nq, g * H:(g + 1) * H].set(w_out.T)
        b_out_all = b_out_all.at[0, g * H:(g + 1) * H].set(b_out)

    return {"wc": wc_all, "wx": wx_all, "b_in": b_in_all,
            "w_out": wout_all, "b_out": b_out_all}


def peephole_qlstm_ref(inputs, params):
    """Pure-JAX reference of the same recurrence (for correctness checking)."""
    T, B, _ = inputs.shape
    H = HIDDEN_SIZE
    hp = jax.lax.Precision.HIGHEST
    c = jnp.zeros((B, H), jnp.float32)
    h = jnp.zeros((B, H), jnp.float32)
    hs = []
    for t in range(T):
        x_t = inputs[t]
        q = (jnp.dot(c, params["wc"], precision=hp)
             + jnp.dot(x_t, params["wx"], precision=hp) + params["b_in"])
        z = jnp.dot(q, params["w_out"], precision=hp) + params["b_out"]
        i_t = jax.nn.sigmoid(z[:, 0:H])
        f_t = jax.nn.sigmoid(z[:, H:2 * H])
        g_t = jnp.tanh(z[:, 2 * H:3 * H])
        o_t = jax.nn.sigmoid(z[:, 3 * H:4 * H])
        c = f_t * c + i_t * g_t
        h = o_t * jnp.tanh(c)
        hs.append(h)
    return jnp.stack(hs, axis=0), h[None], c[None]


if __name__ == "__main__":
    key = jax.random.PRNGKey(0)
    k_x, k_p = jax.random.split(key)
    x = jax.random.normal(k_x, (SEQ_LEN, BATCH, INPUT_SIZE), jnp.float32)
    params = init_params(k_p)

    hseq, h_t, c_t = jax.jit(peephole_qlstm)(x, params)
    jax.block_until_ready((hseq, h_t, c_t))

    assert hseq.shape == (SEQ_LEN, BATCH, HIDDEN_SIZE)
    assert h_t.shape == (1, BATCH, HIDDEN_SIZE)
    assert c_t.shape == (1, BATCH, HIDDEN_SIZE)
    assert bool(jnp.all(jnp.isfinite(hseq)))

    # Correctness vs. pure-JAX reference of the same math.
    hseq_r, h_r, c_r = peephole_qlstm_ref(x, params)
    assert bool(jnp.allclose(hseq, hseq_r, atol=2e-3, rtol=2e-3))
    assert bool(jnp.allclose(h_t, h_r, atol=2e-3, rtol=2e-3))
    assert bool(jnp.allclose(c_t, c_r, atol=2e-3, rtol=2e-3))

    print("KERNEL_OK")
</pallas_src>

<mosaic_0001>
module attributes {stable_mosaic.version = 11 : i64} {
  func.func @peephole_qlstm_kernel(%arg0: memref<16x4xf32, #tpu.memory_space<vmem>>, %arg1: memref<32x32xf32, #tpu.memory_space<vmem>>, %arg2: memref<4x32xf32, #tpu.memory_space<vmem>>, %arg3: memref<1x32xf32, #tpu.memory_space<vmem>>, %arg4: memref<32x128xf32, #tpu.memory_space<vmem>>, %arg5: memref<1x128xf32, #tpu.memory_space<vmem>>, %arg6: memref<8x2x32xf32, #tpu.memory_space<vmem>>, %arg7: memref<1x2x32xf32, #tpu.memory_space<vmem>>, %arg8: memref<1x2x32xf32, #tpu.memory_space<vmem>>) attributes {dimension_semantics = [], scalar_prefetch = 0 : i64, scratch_operands = 0 : i64, tpu.core_type = #tpu.core_type<tc>} {
    %c0 = arith.constant 0 : index
    %c0_0 = arith.constant 0 : index
    %0 = vector.load %arg1[%c0, %c0_0] : memref<32x32xf32, #tpu.memory_space<vmem>>, vector<32x32xf32>
    %c0_1 = arith.constant 0 : index
    %c0_2 = arith.constant 0 : index
    %1 = vector.load %arg4[%c0_1, %c0_2] : memref<32x128xf32, #tpu.memory_space<vmem>>, vector<32x128xf32>
    %c0_3 = arith.constant 0 : index
    %c0_4 = arith.constant 0 : index
    %2 = vector.load %arg5[%c0_3, %c0_4] : memref<1x128xf32, #tpu.memory_space<vmem>>, vector<1x128xf32>
    %c0_5 = arith.constant 0 : index
    %c0_6 = arith.constant 0 : index
    %3 = vector.load %arg0[%c0_5, %c0_6] : memref<16x4xf32, #tpu.memory_space<vmem>>, vector<16x4xf32>
    %c0_7 = arith.constant 0 : index
    %c0_8 = arith.constant 0 : index
    %4 = vector.load %arg2[%c0_7, %c0_8] : memref<4x32xf32, #tpu.memory_space<vmem>>, vector<4x32xf32>
    %cst = arith.constant dense<0.000000e+00> : vector<16x32xf32>
    %5 = tpu.matmul %3, %4, %cst {dimension_numbers = #tpu.dot_dimension_numbers<[1], [0], [0], [1], [0, 0, 1, 1], [], []>} : vector<16x4xf32>, vector<4x32xf32>, vector<16x32xf32> -> vector<16x32xf32>
    %c0_9 = arith.constant 0 : index
    %c0_10 = arith.constant 0 : index
    %6 = vector.load %arg3[%c0_9, %c0_10] : memref<1x32xf32, #tpu.memory_space<vmem>>, vector<1x32xf32>
    %7 = vector.broadcast %6 : vector<1x32xf32> to vector<16x32xf32>
    %8 = arith.addf %5, %7 : vector<16x32xf32>
    %cst_11 = arith.constant 0.000000e+00 : f32
    %9 = vector.broadcast %cst_11 : f32 to vector<2x32xf32>
    %10 = vector.extract_strided_slice %8 {offsets = [0, 0], sizes = [2, 32], strides = [1, 1]} : vector<16x32xf32> to vector<2x32xf32>
    %cst_12 = arith.constant dense<0.000000e+00> : vector<2x32xf32>
    %11 = tpu.matmul %9, %0, %cst_12 {dimension_numbers = #tpu.dot_dimension_numbers<[1], [0], [0], [1], [0, 0, 1, 1], [], []>} : vector<2x32xf32>, vector<32x32xf32>, vector<2x32xf32> -> vector<2x32xf32>
    %12 = arith.addf %10, %11 : vector<2x32xf32>
    %cst_13 = arith.constant dense<0.000000e+00> : vector<2x128xf32>
    %13 = tpu.matmul %12, %1, %cst_13 {dimension_numbers = #tpu.dot_dimension_numbers<[1], [0], [0], [1], [0, 0, 1, 1], [], []>} : vector<2x32xf32>, vector<32x128xf32>, vector<2x128xf32> -> vector<2x128xf32>
    %14 = vector.broadcast %2 : vector<1x128xf32> to vector<2x128xf32>
    %15 = arith.addf %13, %14 : vector<2x128xf32>
    %cst_14 = arith.constant 5.000000e-01 : f32
    %16 = vector.broadcast %cst_14 : f32 to vector<2x128xf32>
    %17 = arith.mulf %16, %15 : vector<2x128xf32>
    %18 = math.tanh %17 : vector<2x128xf32>
    %cst_15 = arith.constant 1.000000e+00 : f32
    %19 = vector.broadcast %cst_15 : f32 to vector<2x128xf32>
    %20 = arith.addf %18, %19 : vector<2x128xf32>
    %cst_16 = arith.constant 5.000000e-01 : f32
    %21 = vector.broadcast %cst_16 : f32 to vector<2x128xf32>
    %22 = arith.mulf %21, %20 : vector<2x128xf32>
    %23 = math.tanh %15 : vector<2x128xf32>
    %24 = vector.extract_strided_slice %22 {offsets = [0, 0], sizes = [2, 32], strides = [1, 1]} : vector<2x128xf32> to vector<2x32xf32>
    %25 = vector.extract_strided_slice %22 {offsets = [0, 32], sizes = [2, 32], strides = [1, 1]} : vector<2x128xf32> to vector<2x32xf32>
    %26 = vector.extract_strided_slice %23 {offsets = [0, 64], sizes = [2, 32], strides = [1, 1]} : vector<2x128xf32> to vector<2x32xf32>
    %27 = vector.extract_strided_slice %22 {offsets = [0, 96], sizes = [2, 32], strides = [1, 1]} : vector<2x128xf32> to vector<2x32xf32>
    %28 = arith.mulf %25, %9 : vector<2x32xf32>
    %29 = arith.mulf %24, %26 : vector<2x32xf32>
    %30 = arith.addf %28, %29 : vector<2x32xf32>
    %31 = math.tanh %30 : vector<2x32xf32>
    %32 = arith.mulf %27, %31 : vector<2x32xf32>
    %c0_17 = arith.constant 0 : index
    %c0_18 = arith.constant 0 : index
    %c0_19 = arith.constant 0 : index
    %33 = vector.load %arg6[%c0_17, %c0_18, %c0_19] : memref<8x2x32xf32, #tpu.memory_space<vmem>>, vector<1x2x32xf32>
    %34 = vector.shape_cast %33 : vector<1x2x32xf32> to vector<2x32xf32>
    %35 = vector.shape_cast %32 : vector<2x32xf32> to vector<1x2x32xf32>
    tpu.vector_store %arg6[%c0_17, %c0_18, %c0_19], %35 {strides = array<i32>} : memref<8x2x32xf32, #tpu.memory_space<vmem>>, vector<1x2x32xf32>,
    %36 = vector.extract_strided_slice %8 {offsets = [2, 0], sizes = [2, 32], strides = [1, 1]} : vector<16x32xf32> to vector<2x32xf32>
    %cst_20 = arith.constant dense<0.000000e+00> : vector<2x32xf32>
    %37 = tpu.matmul %30, %0, %cst_20 {dimension_numbers = #tpu.dot_dimension_numbers<[1], [0], [0], [1], [0, 0, 1, 1], [], []>} : vector<2x32xf32>, vector<32x32xf32>, vector<2x32xf32> -> vector<2x32xf32>
    %38 = arith.addf %36, %37 : vector<2x32xf32>
    %cst_21 = arith.constant dense<0.000000e+00> : vector<2x128xf32>
    %39 = tpu.matmul %38, %1, %cst_21 {dimension_numbers = #tpu.dot_dimension_numbers<[1], [0], [0], [1], [0, 0, 1, 1], [], []>} : vector<2x32xf32>, vector<32x128xf32>, vector<2x128xf32> -> vector<2x128xf32>
    %40 = vector.broadcast %2 : vector<1x128xf32> to vector<2x128xf32>
    %41 = arith.addf %39, %40 : vector<2x128xf32>
    %cst_22 = arith.constant 5.000000e-01 : f32
    %42 = vector.broadcast %cst_22 : f32 to vector<2x128xf32>
    %43 = arith.mulf %42, %41 : vector<2x128xf32>
    %44 = math.tanh %43 : vector<2x128xf32>
    %cst_23 = arith.constant 1.000000e+00 : f32
    %45 = vector.broadcast %cst_23 : f32 to vector<2x128xf32>
    %46 = arith.addf %44, %45 : vector<2x128xf32>
    %cst_24 = arith.constant 5.000000e-01 : f32
    %47 = vector.broadcast %cst_24 : f32 to vector<2x128xf32>
    %48 = arith.mulf %47, %46 : vector<2x128xf32>
    %49 = math.tanh %41 : vector<2x128xf32>
    %50 = vector.extract_strided_slice %48 {offsets = [0, 0], sizes = [2, 32], strides = [1, 1]} : vector<2x128xf32> to vector<2x32xf32>
    %51 = vector.extract_strided_slice %48 {offsets = [0, 32], sizes = [2, 32], strides = [1, 1]} : vector<2x128xf32> to vector<2x32xf32>
    %52 = vector.extract_strided_slice %49 {offsets = [0, 64], sizes = [2, 32], strides = [1, 1]} : vector<2x128xf32> to vector<2x32xf32>
    %53 = vector.extract_strided_slice %48 {offsets = [0, 96], sizes = [2, 32], strides = [1, 1]} : vector<2x128xf32> to vector<2x32xf32>
    %54 = arith.mulf %51, %30 : vector<2x32xf32>
    %55 = arith.mulf %50, %52 : vector<2x32xf32>
    %56 = arith.addf %54, %55 : vector<2x32xf32>
    %57 = math.tanh %56 : vector<2x32xf32>
    %58 = arith.mulf %53, %57 : vector<2x32xf32>
    %c1 = arith.constant 1 : index
    %c0_25 = arith.constant 0 : index
    %c0_26 = arith.constant 0 : index
    %59 = vector.load %arg6[%c1, %c0_25, %c0_26] : memref<8x2x32xf32, #tpu.memory_space<vmem>>, vector<1x2x32xf32>
    %60 = vector.shape_cast %59 : vector<1x2x32xf32> to vector<2x32xf32>
    %61 = vector.shape_cast %58 : vector<2x32xf32> to vector<1x2x32xf32>
    tpu.vector_store %arg6[%c1, %c0_25, %c0_26], %61 {strides = array<i32>} : memref<8x2x32xf32, #tpu.memory_space<vmem>>, vector<1x2x32xf32>,
    %62 = vector.extract_strided_slice %8 {offsets = [4, 0], sizes = [2, 32], strides = [1, 1]} : vector<16x32xf32> to vector<2x32xf32>
    %cst_27 = arith.constant dense<0.000000e+00> : vector<2x32xf32>
    %63 = tpu.matmul %56, %0, %cst_27 {dimension_numbers = #tpu.dot_dimension_numbers<[1], [0], [0], [1], [0, 0, 1, 1], [], []>} : vector<2x32xf32>, vector<32x32xf32>, vector<2x32xf32> -> vector<2x32xf32>
    %64 = arith.addf %62, %63 : vector<2x32xf32>
    %cst_28 = arith.constant dense<0.000000e+00> : vector<2x128xf32>
    %65 = tpu.matmul %64, %1, %cst_28 {dimension_numbers = #tpu.dot_dimension_numbers<[1], [0], [0], [1], [0, 0, 1, 1], [], []>} : vector<2x32xf32>, vector<32x128xf32>, vector<2x128xf32> -> vector<2x128xf32>
    %66 = vector.broadcast %2 : vector<1x128xf32> to vector<2x128xf32>
    %67 = arith.addf %65, %66 : vector<2x128xf32>
    %cst_29 = arith.constant 5.000000e-01 : f32
    %68 = vector.broadcast %cst_29 : f32 to vector<2x128xf32>
    %69 = arith.mulf %68, %67 : vector<2x128xf32>
    %70 = math.tanh %69 : vector<2x128xf32>
    %cst_30 = arith.constant 1.000000e+00 : f32
    %71 = vector.broadcast %cst_30 : f32 to vector<2x128xf32>
    %72 = arith.addf %70, %71 : vector<2x128xf32>
    %cst_31 = arith.constant 5.000000e-01 : f32
    %73 = vector.broadcast %cst_31 : f32 to vector<2x128xf32>
    %74 = arith.mulf %73, %72 : vector<2x128xf32>
    %75 = math.tanh %67 : vector<2x128xf32>
    %76 = vector.extract_strided_slice %74 {offsets = [0, 0], sizes = [2, 32], strides = [1, 1]} : vector<2x128xf32> to vector<2x32xf32>
    %77 = vector.extract_strided_slice %74 {offsets = [0, 32], sizes = [2, 32], strides = [1, 1]} : vector<2x128xf32> to vector<2x32xf32>
    %78 = vector.extract_strided_slice %75 {offsets = [0, 64], sizes = [2, 32], strides = [1, 1]} : vector<2x128xf32> to vector<2x32xf32>
    %79 = vector.extract_strided_slice %74 {offsets = [0, 96], sizes = [2, 32], strides = [1, 1]} : vector<2x128xf32> to vector<2x32xf32>
    %80 = arith.mulf %77, %56 : vector<2x32xf32>
    %81 = arith.mulf %76, %78 : vector<2x32xf32>
    %82 = arith.addf %80, %81 : vector<2x32xf32>
    %83 = math.tanh %82 : vector<2x32xf32>
    %84 = arith.mulf %79, %83 : vector<2x32xf32>
    %c2 = arith.constant 2 : index
    %c0_32 = arith.constant 0 : index
    %c0_33 = arith.constant 0 : index
    %85 = vector.load %arg6[%c2, %c0_32, %c0_33] : memref<8x2x32xf32, #tpu.memory_space<vmem>>, vector<1x2x32xf32>
    %86 = vector.shape_cast %85 : vector<1x2x32xf32> to vector<2x32xf32>
    %87 = vector.shape_cast %84 : vector<2x32xf32> to vector<1x2x32xf32>
    tpu.vector_store %arg6[%c2, %c0_32, %c0_33], %87 {strides = array<i32>} : memref<8x2x32xf32, #tpu.memory_space<vmem>>, vector<1x2x32xf32>,
    %88 = vector.extract_strided_slice %8 {offsets = [6, 0], sizes = [2, 32], strides = [1, 1]} : vector<16x32xf32> to vector<2x32xf32>
    %cst_34 = arith.constant dense<0.000000e+00> : vector<2x32xf32>
    %89 = tpu.matmul %82, %0, %cst_34 {dimension_numbers = #tpu.dot_dimension_numbers<[1], [0], [0], [1], [0, 0, 1, 1], [], []>} : vector<2x32xf32>, vector<32x32xf32>, vector<2x32xf32> -> vector<2x32xf32>
    %90 = arith.addf %88, %89 : vector<2x32xf32>
    %cst_35 = arith.constant dense<0.000000e+00> : vector<2x128xf32>
    %91 = tpu.matmul %90, %1, %cst_35 {dimension_numbers = #tpu.dot_dimension_numbers<[1], [0], [0], [1], [0, 0, 1, 1], [], []>} : vector<2x32xf32>, vector<32x128xf32>, vector<2x128xf32> -> vector<2x128xf32>
    %92 = vector.broadcast %2 : vector<1x128xf32> to vector<2x128xf32>
    %93 = arith.addf %91, %92 : vector<2x128xf32>
    %cst_36 = arith.constant 5.000000e-01 : f32
    %94 = vector.broadcast %cst_36 : f32 to vector<2x128xf32>
    %95 = arith.mulf %94, %93 : vector<2x128xf32>
    %96 = math.tanh %95 : vector<2x128xf32>
    %cst_37 = arith.constant 1.000000e+00 : f32
    %97 = vector.broadcast %cst_37 : f32 to vector<2x128xf32>
    %98 = arith.addf %96, %97 : vector<2x128xf32>
    %cst_38 = arith.constant 5.000000e-01 : f32
    %99 = vector.broadcast %cst_38 : f32 to vector<2x128xf32>
    %100 = arith.mulf %99, %98 : vector<2x128xf32>
    %101 = math.tanh %93 : vector<2x128xf32>
    %102 = vector.extract_strided_slice %100 {offsets = [0, 0], sizes = [2, 32], strides = [1, 1]} : vector<2x128xf32> to vector<2x32xf32>
    %103 = vector.extract_strided_slice %100 {offsets = [0, 32], sizes = [2, 32], strides = [1, 1]} : vector<2x128xf32> to vector<2x32xf32>
    %104 = vector.extract_strided_slice %101 {offsets = [0, 64], sizes = [2, 32], strides = [1, 1]} : vector<2x128xf32> to vector<2x32xf32>
    %105 = vector.extract_strided_slice %100 {offsets = [0, 96], sizes = [2, 32], strides = [1, 1]} : vector<2x128xf32> to vector<2x32xf32>
    %106 = arith.mulf %103, %82 : vector<2x32xf32>
    %107 = arith.mulf %102, %104 : vector<2x32xf32>
    %108 = arith.addf %106, %107 : vector<2x32xf32>
    %109 = math.tanh %108 : vector<2x32xf32>
    %110 = arith.mulf %105, %109 : vector<2x32xf32>
    %c3 = arith.constant 3 : index
    %c0_39 = arith.constant 0 : index
    %c0_40 = arith.constant 0 : index
    %111 = vector.load %arg6[%c3, %c0_39, %c0_40] : memref<8x2x32xf32, #tpu.memory_space<vmem>>, vector<1x2x32xf32>
    %112 = vector.shape_cast %111 : vector<1x2x32xf32> to vector<2x32xf32>
    %113 = vector.shape_cast %110 : vector<2x32xf32> to vector<1x2x32xf32>
    tpu.vector_store %arg6[%c3, %c0_39, %c0_40], %113 {strides = array<i32>} : memref<8x2x32xf32, #tpu.memory_space<vmem>>, vector<1x2x32xf32>,
    %114 = vector.extract_strided_slice %8 {offsets = [8, 0], sizes = [2, 32], strides = [1, 1]} : vector<16x32xf32> to vector<2x32xf32>
    %cst_41 = arith.constant dense<0.000000e+00> : vector<2x32xf32>
    %115 = tpu.matmul %108, %0, %cst_41 {dimension_numbers = #tpu.dot_dimension_numbers<[1], [0], [0], [1], [0, 0, 1, 1], [], []>} : vector<2x32xf32>, vector<32x32xf32>, vector<2x32xf32> -> vector<2x32xf32>
    %116 = arith.addf %114, %115 : vector<2x32xf32>
    %cst_42 = arith.constant dense<0.000000e+00> : vector<2x128xf32>
    %117 = tpu.matmul %116, %1, %cst_42 {dimension_numbers = #tpu.dot_dimension_numbers<[1], [0], [0], [1], [0, 0, 1, 1], [], []>} : vector<2x32xf32>, vector<32x128xf32>, vector<2x128xf32> -> vector<2x128xf32>
    %118 = vector.broadcast %2 : vector<1x128xf32> to vector<2x128xf32>
    %119 = arith.addf %117, %118 : vector<2x128xf32>
    %cst_43 = arith.constant 5.000000e-01 : f32
    %120 = vector.broadcast %cst_43 : f32 to vector<2x128xf32>
    %121 = arith.mulf %120, %119 : vector<2x128xf32>
    %122 = math.tanh %121 : vector<2x128xf32>
    %cst_44 = arith.constant 1.000000e+00 : f32
    %123 = vector.broadcast %cst_44 : f32 to vector<2x128xf32>
    %124 = arith.addf %122, %123 : vector<2x128xf32>
    %cst_45 = arith.constant 5.000000e-01 : f32
    %125 = vector.broadcast %cst_45 : f32 to vector<2x128xf32>
    %126 = arith.mulf %125, %124 : vector<2x128xf32>
    %127 = math.tanh %119 : vector<2x128xf32>
    %128 = vector.extract_strided_slice %126 {offsets = [0, 0], sizes = [2, 32], strides = [1, 1]} : vector<2x128xf32> to vector<2x32xf32>
    %129 = vector.extract_strided_slice %126 {offsets = [0, 32], sizes = [2, 32], strides = [1, 1]} : vector<2x128xf32> to vector<2x32xf32>
    %130 = vector.extract_strided_slice %127 {offsets = [0, 64], sizes = [2, 32], strides = [1, 1]} : vector<2x128xf32> to vector<2x32xf32>
    %131 = vector.extract_strided_slice %126 {offsets = [0, 96], sizes = [2, 32], strides = [1, 1]} : vector<2x128xf32> to vector<2x32xf32>
    %132 = arith.mulf %129, %108 : vector<2x32xf32>
    %133 = arith.mulf %128, %130 : vector<2x32xf32>
    %134 = arith.addf %132, %133 : vector<2x32xf32>
    %135 = math.tanh %134 : vector<2x32xf32>
    %136 = arith.mulf %131, %135 : vector<2x32xf32>
    %c4 = arith.constant 4 : index
    %c0_46 = arith.constant 0 : index
    %c0_47 = arith.constant 0 : index
    %137 = vector.load %arg6[%c4, %c0_46, %c0_47] : memref<8x2x32xf32, #tpu.memory_space<vmem>>, vector<1x2x32xf32>
    %138 = vector.shape_cast %137 : vector<1x2x32xf32> to vector<2x32xf32>
    %139 = vector.shape_cast %136 : vector<2x32xf32> to vector<1x2x32xf32>
    tpu.vector_store %arg6[%c4, %c0_46, %c0_47], %139 {strides = array<i32>} : memref<8x2x32xf32, #tpu.memory_space<vmem>>, vector<1x2x32xf32>,
    %140 = vector.extract_strided_slice %8 {offsets = [10, 0], sizes = [2, 32], strides = [1, 1]} : vector<16x32xf32> to vector<2x32xf32>
    %cst_48 = arith.constant dense<0.000000e+00> : vector<2x32xf32>
    %141 = tpu.matmul %134, %0, %cst_48 {dimension_numbers = #tpu.dot_dimension_numbers<[1], [0], [0], [1], [0, 0, 1, 1], [], []>} : vector<2x32xf32>, vector<32x32xf32>, vector<2x32xf32> -> vector<2x32xf32>
    %142 = arith.addf %140, %141 : vector<2x32xf32>
    %cst_49 = arith.constant dense<0.000000e+00> : vector<2x128xf32>
    %143 = tpu.matmul %142, %1, %cst_49 {dimension_numbers = #tpu.dot_dimension_numbers<[1], [0], [0], [1], [0, 0, 1, 1], [], []>} : vector<2x32xf32>, vector<32x128xf32>, vector<2x128xf32> -> vector<2x128xf32>
    %144 = vector.broadcast %2 : vector<1x128xf32> to vector<2x128xf32>
    %145 = arith.addf %143, %144 : vector<2x128xf32>
    %cst_50 = arith.constant 5.000000e-01 : f32
    %146 = vector.broadcast %cst_50 : f32 to vector<2x128xf32>
    %147 = arith.mulf %146, %145 : vector<2x128xf32>
    %148 = math.tanh %147 : vector<2x128xf32>
    %cst_51 = arith.constant 1.000000e+00 : f32
    %149 = vector.broadcast %cst_51 : f32 to vector<2x128xf32>
    %150 = arith.addf %148, %149 : vector<2x128xf32>
    %cst_52 = arith.constant 5.000000e-01 : f32
    %151 = vector.broadcast %cst_52 : f32 to vector<2x128xf32>
    %152 = arith.mulf %151, %150 : vector<2x128xf32>
    %153 = math.tanh %145 : vector<2x128xf32>
    %154 = vector.extract_strided_slice %152 {offsets = [0, 0], sizes = [2, 32], strides = [1, 1]} : vector<2x128xf32> to vector<2x32xf32>
    %155 = vector.extract_strided_slice %152 {offsets = [0, 32], sizes = [2, 32], strides = [1, 1]} : vector<2x128xf32> to vector<2x32xf32>
    %156 = vector.extract_strided_slice %153 {offsets = [0, 64], sizes = [2, 32], strides = [1, 1]} : vector<2x128xf32> to vector<2x32xf32>
    %157 = vector.extract_strided_slice %152 {offsets = [0, 96], sizes = [2, 32], strides = [1, 1]} : vector<2x128xf32> to vector<2x32xf32>
    %158 = arith.mulf %155, %134 : vector<2x32xf32>
    %159 = arith.mulf %154, %156 : vector<2x32xf32>
    %160 = arith.addf %158, %159 : vector<2x32xf32>
    %161 = math.tanh %160 : vector<2x32xf32>
    %162 = arith.mulf %157, %161 : vector<2x32xf32>
    %c5 = arith.constant 5 : index
    %c0_53 = arith.constant 0 : index
    %c0_54 = arith.constant 0 : index
    %163 = vector.load %arg6[%c5, %c0_53, %c0_54] : memref<8x2x32xf32, #tpu.memory_space<vmem>>, vector<1x2x32xf32>
    %164 = vector.shape_cast %163 : vector<1x2x32xf32> to vector<2x32xf32>
    %165 = vector.shape_cast %162 : vector<2x32xf32> to vector<1x2x32xf32>
    tpu.vector_store %arg6[%c5, %c0_53, %c0_54], %165 {strides = array<i32>} : memref<8x2x32xf32, #tpu.memory_space<vmem>>, vector<1x2x32xf32>,
    %166 = vector.extract_strided_slice %8 {offsets = [12, 0], sizes = [2, 32], strides = [1, 1]} : vector<16x32xf32> to vector<2x32xf32>
    %cst_55 = arith.constant dense<0.000000e+00> : vector<2x32xf32>
    %167 = tpu.matmul %160, %0, %cst_55 {dimension_numbers = #tpu.dot_dimension_numbers<[1], [0], [0], [1], [0, 0, 1, 1], [], []>} : vector<2x32xf32>, vector<32x32xf32>, vector<2x32xf32> -> vector<2x32xf32>
    %168 = arith.addf %166, %167 : vector<2x32xf32>
    %cst_56 = arith.constant dense<0.000000e+00> : vector<2x128xf32>
    %169 = tpu.matmul %168, %1, %cst_56 {dimension_numbers = #tpu.dot_dimension_numbers<[1], [0], [0], [1], [0, 0, 1, 1], [], []>} : vector<2x32xf32>, vector<32x128xf32>, vector<2x128xf32> -> vector<2x128xf32>
    %170 = vector.broadcast %2 : vector<1x128xf32> to vector<2x128xf32>
    %171 = arith.addf %169, %170 : vector<2x128xf32>
    %cst_57 = arith.constant 5.000000e-01 : f32
    %172 = vector.broadcast %cst_57 : f32 to vector<2x128xf32>
    %173 = arith.mulf %172, %171 : vector<2x128xf32>
    %174 = math.tanh %173 : vector<2x128xf32>
    %cst_58 = arith.constant 1.000000e+00 : f32
    %175 = vector.broadcast %cst_58 : f32 to vector<2x128xf32>
    %176 = arith.addf %174, %175 : vector<2x128xf32>
    %cst_59 = arith.constant 5.000000e-01 : f32
    %177 = vector.broadcast %cst_59 : f32 to vector<2x128xf32>
    %178 = arith.mulf %177, %176 : vector<2x128xf32>
    %179 = math.tanh %171 : vector<2x128xf32>
    %180 = vector.extract_strided_slice %178 {offsets = [0, 0], sizes = [2, 32], strides = [1, 1]} : vector<2x128xf32> to vector<2x32xf32>
    %181 = vector.extract_strided_slice %178 {offsets = [0, 32], sizes = [2, 32], strides = [1, 1]} : vector<2x128xf32> to vector<2x32xf32>
    %182 = vector.extract_strided_slice %179 {offsets = [0, 64], sizes = [2, 32], strides = [1, 1]} : vector<2x128xf32> to vector<2x32xf32>
    %183 = vector.extract_strided_slice %178 {offsets = [0, 96], sizes = [2, 32], strides = [1, 1]} : vector<2x128xf32> to vector<2x32xf32>
    %184 = arith.mulf %181, %160 : vector<2x32xf32>
    %185 = arith.mulf %180, %182 : vector<2x32xf32>
    %186 = arith.addf %184, %185 : vector<2x32xf32>
    %187 = math.tanh %186 : vector<2x32xf32>
    %188 = arith.mulf %183, %187 : vector<2x32xf32>
    %c6 = arith.constant 6 : index
    %c0_60 = arith.constant 0 : index
    %c0_61 = arith.constant 0 : index
    %189 = vector.load %arg6[%c6, %c0_60, %c0_61] : memref<8x2x32xf32, #tpu.memory_space<vmem>>, vector<1x2x32xf32>
    %190 = vector.shape_cast %189 : vector<1x2x32xf32> to vector<2x32xf32>
    %191 = vector.shape_cast %188 : vector<2x32xf32> to vector<1x2x32xf32>
    tpu.vector_store %arg6[%c6, %c0_60, %c0_61], %191 {strides = array<i32>} : memref<8x2x32xf32, #tpu.memory_space<vmem>>, vector<1x2x32xf32>,
    %192 = vector.extract_strided_slice %8 {offsets = [14, 0], sizes = [2, 32], strides = [1, 1]} : vector<16x32xf32> to vector<2x32xf32>
    %cst_62 = arith.constant dense<0.000000e+00> : vector<2x32xf32>
    %193 = tpu.matmul %186, %0, %cst_62 {dimension_numbers = #tpu.dot_dimension_numbers<[1], [0], [0], [1], [0, 0, 1, 1], [], []>} : vector<2x32xf32>, vector<32x32xf32>, vector<2x32xf32> -> vector<2x32xf32>
    %194 = arith.addf %192, %193 : vector<2x32xf32>
    %cst_63 = arith.constant dense<0.000000e+00> : vector<2x128xf32>
    %195 = tpu.matmul %194, %1, %cst_63 {dimension_numbers = #tpu.dot_dimension_numbers<[1], [0], [0], [1], [0, 0, 1, 1], [], []>} : vector<2x32xf32>, vector<32x128xf32>, vector<2x128xf32> -> vector<2x128xf32>
    %196 = vector.broadcast %2 : vector<1x128xf32> to vector<2x128xf32>
    %197 = arith.addf %195, %196 : vector<2x128xf32>
    %cst_64 = arith.constant 5.000000e-01 : f32
    %198 = vector.broadcast %cst_64 : f32 to vector<2x128xf32>
    %199 = arith.mulf %198, %197 : vector<2x128xf32>
    %200 = math.tanh %199 : vector<2x128xf32>
    %cst_65 = arith.constant 1.000000e+00 : f32
    %201 = vector.broadcast %cst_65 : f32 to vector<2x128xf32>
    %202 = arith.addf %200, %201 : vector<2x128xf32>
    %cst_66 = arith.constant 5.000000e-01 : f32
    %203 = vector.broadcast %cst_66 : f32 to vector<2x128xf32>
    %204 = arith.mulf %203, %202 : vector<2x128xf32>
    %205 = math.tanh %197 : vector<2x128xf32>
    %206 = vector.extract_strided_slice %204 {offsets = [0, 0], sizes = [2, 32], strides = [1, 1]} : vector<2x128xf32> to vector<2x32xf32>
    %207 = vector.extract_strided_slice %204 {offsets = [0, 32], sizes = [2, 32], strides = [1, 1]} : vector<2x128xf32> to vector<2x32xf32>
    %208 = vector.extract_strided_slice %205 {offsets = [0, 64], sizes = [2, 32], strides = [1, 1]} : vector<2x128xf32> to vector<2x32xf32>
    %209 = vector.extract_strided_slice %204 {offsets = [0, 96], sizes = [2, 32], strides = [1, 1]} : vector<2x128xf32> to vector<2x32xf32>
    %210 = arith.mulf %207, %186 : vector<2x32xf32>
    %211 = arith.mulf %206, %208 : vector<2x32xf32>
    %212 = arith.addf %210, %211 : vector<2x32xf32>
    %213 = math.tanh %212 : vector<2x32xf32>
    %214 = arith.mulf %209, %213 : vector<2x32xf32>
    %c7 = arith.constant 7 : index
    %c0_67 = arith.constant 0 : index
    %c0_68 = arith.constant 0 : index
    %215 = vector.load %arg6[%c7, %c0_67, %c0_68] : memref<8x2x32xf32, #tpu.memory_space<vmem>>, vector<1x2x32xf32>
    %216 = vector.shape_cast %215 : vector<1x2x32xf32> to vector<2x32xf32>
    %217 = vector.shape_cast %214 : vector<2x32xf32> to vector<1x2x32xf32>
    tpu.vector_store %arg6[%c7, %c0_67, %c0_68], %217 {strides = array<i32>} : memref<8x2x32xf32, #tpu.memory_space<vmem>>, vector<1x2x32xf32>,
    %c0_69 = arith.constant 0 : index
    %c0_70 = arith.constant 0 : index
    %c0_71 = arith.constant 0 : index
    %218 = vector.load %arg7[%c0_69, %c0_70, %c0_71] : memref<1x2x32xf32, #tpu.memory_space<vmem>>, vector<1x2x32xf32>
    %219 = vector.shape_cast %218 : vector<1x2x32xf32> to vector<2x32xf32>
    %220 = vector.shape_cast %214 : vector<2x32xf32> to vector<1x2x32xf32>
    tpu.vector_store %arg7[%c0_69, %c0_70, %c0_71], %220 {strides = array<i32>} : memref<1x2x32xf32, #tpu.memory_space<vmem>>, vector<1x2x32xf32>,
    %c0_72 = arith.constant 0 : index
    %c0_73 = arith.constant 0 : index
    %c0_74 = arith.constant 0 : index
    %221 = vector.load %arg8[%c0_72, %c0_73, %c0_74] : memref<1x2x32xf32, #tpu.memory_space<vmem>>, vector<1x2x32xf32>
    %222 = vector.shape_cast %221 : vector<1x2x32xf32> to vector<2x32xf32>
    %223 = vector.shape_cast %212 : vector<2x32xf32> to vector<1x2x32xf32>
    tpu.vector_store %arg8[%c0_72, %c0_73, %c0_74], %223 {strides = array<i32>} : memref<1x2x32xf32, #tpu.memory_space<vmem>>, vector<1x2x32xf32>,
    return
  }
}

</mosaic_0001>

<llo_original>
// kernel: peephole_qlstm.1
$region0: #{peephole_qlstm.1}
  #allocation0 [shape = 'u32[]', space=smem, size = 0x4, offset = 0x4, fixed_abs, tag = 'smem constant byte address 0x4 - core index']
  #allocation1 [shape = 'u32[144,128]{1,0:T(1,128)}', space=vmem, size = 0x12000, scoped, tag = 'internal scratch']
  %s0 = inlined_call_operand.vmem [shape: f32[16,4], index: 0, kind: input, shape index: {}]
  %s1 = inlined_call_operand.vmem [shape: f32[32,32], index: 1, kind: input, shape index: {}]
  %s2 = inlined_call_operand.hbm [shape: f32[4,32], index: 2, kind: input, shape index: {}]
  %s3 = inlined_call_operand.vmem [shape: f32[1,32], index: 3, kind: input, shape index: {}]
  %s4 = inlined_call_operand.hbm [shape: f32[32,128], index: 4, kind: input, shape index: {}]
  %s5 = inlined_call_operand.hbm [shape: f32[1,128], index: 5, kind: input, shape index: {}]
  %s6 = inlined_call_operand.hbm [shape: f32[8,2,32], index: 6, kind: output, shape index: {0}]
  %s7 = inlined_call_operand.hbm [shape: f32[1,2,32], index: 7, kind: output, shape index: {1}]
  %s8 = inlined_call_operand.hbm [shape: f32[1,2,32], index: 8, kind: output, shape index: {2}]
  %9 = xla_tuple %s6, %s7, %s8
  %s10 = sld [smem:[#allocation0]]
  $region62: #{peephole_qlstm.1} parent=0
    _
  %s12 = ssub.s32 1, %s10
  %s13 = scalar_select 0, %s12, %s10
  $region1: #{peephole_qlstm.1} parent=0
    #allocation2 [shape = 'u8[2048]{0}', space=vmem, size = 0x800, scoped, tag = 'input window, operand 2, single buffered']
    #allocation3 [shape = 's32[1]{0}', space=sflag, size = 0x4, scoped, tag = 'scoped memory for peephole_qlstm.1']
    #allocation4 [shape = 's32[1]{0}', space=sflag, size = 0x4, scoped, tag = 'scoped memory for peephole_qlstm.1']
    #allocation5 [shape = 'u8[16384]{0}', space=vmem, size = 0x4000, scoped, tag = 'input window, operand 4, single buffered']
    #allocation6 [shape = 's32[1]{0}', space=sflag, size = 0x4, scoped, tag = 'scoped memory for peephole_qlstm.1']
    #allocation7 [shape = 'u8[512]{0}', space=vmem, size = 0x400, scoped, tag = 'input window, operand 5, single buffered']
    #allocation8 [shape = 'u8[8192]{0}', space=vmem, size = 0x2000, scoped, tag = 'output window, operand 0, single buffered']
    #allocation9 [shape = 'u8[1024]{0}', space=vmem, size = 0x400, scoped, tag = 'output window, operand 1, single buffered']
    #allocation10 [shape = 's32[1]{0}', space=sflag, size = 0x4, scoped, tag = 'scoped memory for peephole_qlstm.1']
    #allocation11 [shape = 'u8[1024]{0}', space=vmem, size = 0x400, scoped, tag = 'output window, operand 2, single buffered']
    %14 = vsyncpa [#allocation3], 0
    %15 = vsyncpa [#allocation6], 0
    %16 = vsyncpa [#allocation4], 0
    %17 = vsyncpa [#allocation10], 0
    // Predicated region
    $region2: #{peephole_qlstm.1} parent=1 // pred_check
      _
    $region3: #{peephole_qlstm.1} parent=1 // pred_check_branch
      %19 = sbr.rel (0) target = $region5
    $region4: #{peephole_qlstm.1} parent=1 // pred_region
      _
    $region5: #{peephole_qlstm.1} parent=1 // pred_fallthru
      _
    // Predicated region
    $region6: #{peephole_qlstm.1} parent=1 // pred_check
      _
    $region7: #{peephole_qlstm.1} parent=1 // pred_check_branch
      %21 = sbr.rel (0) target = $region9
    $region8: #{peephole_qlstm.1} parent=1 // pred_region
      _
    $region9: #{peephole_qlstm.1} parent=1 // pred_fallthru
      _
    // Predicated region
    $region10: #{peephole_qlstm.1} parent=1 // pred_check
      _
    $region11: #{peephole_qlstm.1} parent=1 // pred_check_branch
      %23 = sbr.rel (0) target = $region13
    $region12: #{peephole_qlstm.1} parent=1 // pred_region
      %s25 = ssub.s32 64, 64
      %26 = vsyncadd [#allocation3], %s25
      %s28 = sshll.u32 [#allocation2], 4
      %s29 = int_to_ptr.vmem [resolvable:$true] %s28
      %31 = dma.hbm_to_vmem [thread:$0]  %s2, 64, %s29, [#allocation3]
    $region13: #{peephole_qlstm.1} parent=1 // pred_fallthru
      _
    // Predicated region
    $region14: #{peephole_qlstm.1} parent=1 // pred_check
      _
    $region15: #{peephole_qlstm.1} parent=1 // pred_check_branch
      %33 = sbr.rel (0) target = $region17
    $region16: #{peephole_qlstm.1} parent=1 // pred_region
      _
    $region17: #{peephole_qlstm.1} parent=1 // pred_fallthru
      _
    // Predicated region
    $region18: #{peephole_qlstm.1} parent=1 // pred_check
      _
    $region19: #{peephole_qlstm.1} parent=1 // pred_check_branch
      %35 = sbr.rel (0) target = $region21
    $region20: #{peephole_qlstm.1} parent=1 // pred_region
      %s37 = ssub.s32 512, 512
      %38 = vsyncadd [#allocation6], %s37
      %s39 = sshll.u32 [#allocation5], 4
      %s40 = int_to_ptr.vmem [resolvable:$true] %s39
      %45 = dma.hbm_to_vmem [thread:$0]  %s4, 512, %s40, [#allocation6], 128, 128, 8
    $region21: #{peephole_qlstm.1} parent=1 // pred_fallthru
      _
    // Predicated region
    $region22: #{peephole_qlstm.1} parent=1 // pred_check
      _
    $region23: #{peephole_qlstm.1} parent=1 // pred_check_branch
      %47 = sbr.rel (0) target = $region25
    $region24: #{peephole_qlstm.1} parent=1 // pred_region
      %s49 = ssub.s32 16, 16
      %50 = vsyncadd [#allocation6], %s49
      %s52 = sshll.u32 [#allocation7], 4
      %s53 = int_to_ptr.vmem [resolvable:$true] %s52
      %55 = dma.hbm_to_vmem [thread:$0]  %s5, 16, %s53, [#allocation6]
    $region25: #{peephole_qlstm.1} parent=1 // pred_fallthru
      _
    // Predicated region
    $region26: #{peephole_qlstm.1} parent=1 // pred_check
      _
    $region27: #{peephole_qlstm.1} parent=1 // pred_check_branch
      %57 = sbr.rel (0) target = $region29
    $region28: #{peephole_qlstm.1} parent=1 // pred_region
      %58 = dma.done [#allocation3], 64
    $region29: #{peephole_qlstm.1} parent=1 // pred_fallthru
      _
    // Predicated region
    $region30: #{peephole_qlstm.1} parent=1 // pred_check
      _
    $region31: #{peephole_qlstm.1} parent=1 // pred_check_branch
      %60 = sbr.rel (0) target = $region33
    $region32: #{peephole_qlstm.1} parent=1 // pred_region
      %61 = dma.done [#allocation6], 512
    $region33: #{peephole_qlstm.1} parent=1 // pred_fallthru
      _
    // Predicated region
    $region34: #{peephole_qlstm.1} parent=1 // pred_check
      _
    $region35: #{peephole_qlstm.1} parent=1 // pred_check_branch
      %63 = sbr.rel (0) target = $region37
    $region36: #{peephole_qlstm.1} parent=1 // pred_region
      %64 = dma.done [#allocation6], 16
    $region37: #{peephole_qlstm.1} parent=1 // pred_fallthru
      _
    %v65 = vld [vmem:[%s1] sm:$0xff]
    %v66 = vld [vmem:[%s1 + $0x8] sm:$0xff]
    %v67 = vld [vmem:[%s1 + $0x10] sm:$0xff]
    %v68 = vld [vmem:[%s1 + $0x18] sm:$0xff]
    %v69 = vld [vmem:[#allocation5] sm:$0xff]
    %v70 = vld [vmem:[#allocation5 + $0x8] sm:$0xff]
    %v71 = vld [vmem:[#allocation5 + $0x10] sm:$0xff]
    %v72 = vld [vmem:[#allocation5 + $0x18] sm:$0xff]
    %v73 = vld [vmem:[#allocation7] sm:$0x1]
    %v74 = vld [vmem:[%s0] sm:$0xff]
    %v75 = vld [vmem:[%s0 + $0x8] sm:$0xff]
    %v76 = vld [vmem:[#allocation2] sm:$0xf]
    %v77 = vld [vmem:[%s3] sm:$0x1]
    %v79 = vlaneseq
    %v80 = vshrl.u32 %v79, 7
    %v81 = vsub.s32 0, %v80
    %v82 = vrot.slane %v77, %v81
    %vm84 = vcmask 31744
    %v86 = vsel %vm84, %v74, 0
    %v89 = vsel %vm84, %v75, 0
    %vm91 = vcmask 1043456
    %v93 = vsel %vm91, %v76, 0
    %95 = vmatprep.subr.mxu0 0.0
    %96 = vmatpush1.msra.mxu0 0.0
    %97 = vmatprep.subr.mxu0 0.0
    %98 = vmatpush1.msra.mxu0 0.0
    %99 = vmatprep.subr.mxu0 0.0
    %100 = vmatpush1.msra.mxu0 0.0
    %101 = vmatprep.subr.mxu0 0.0
    %102 = vmatpush1.msra.mxu0 0.0
    %103 = vmatprep.subr.mxu0 0.0
    %104 = vmatpush1.msra.mxu0 0.0
    %105 = vmatprep.subr.mxu0 0.0
    %106 = vmatpush1.msra.mxu0 0.0
    %107 = vmatprep.subr.mxu0 0.0
    %108 = vmatpush1.msra.mxu0 0.0
    %109 = vmatprep.subr.mxu0 0.0
    %110 = vmatpush1.msra.mxu0 0.0
    %111 = vmatprep.subr.mxu0 0.0
    %112 = vmatpush1.msra.mxu0 0.0
    %113 = vmatprep.subr.mxu0 0.0
    %114 = vmatpush1.msra.mxu0 0.0
    %115 = vmatprep.subr.mxu0 0.0
    %116 = vmatpush1.msra.mxu0 0.0
    %117 = vmatprep.subr.mxu0 0.0
    %118 = vmatpush1.msra.mxu0 0.0
    %119 = vmatprep.subr.mxu0 0.0
    %120 = vmatpush1.msra.mxu0 0.0
    %121 = vmatprep.subr.mxu0 0.0
    %122 = vmatpush1.msra.mxu0 0.0
    %123 = vmatprep.subr.mxu0 0.0
    %124 = vmatpush1.msra.mxu0 0.0
    %125 = vmatprep.subr.mxu0 0.0
    %126 = vmatpush1.msra.mxu0 %v93
    %127 = vmatprep.subr.mxu0 0.0
    %128 = vmatpush2.msra.mxu0 0.0
    %129 = vmatprep.subr.mxu0 0.0
    %130 = vmatpush2.msra.mxu0 0.0
    %131 = vmatprep.subr.mxu0 0.0
    %132 = vmatpush2.msra.mxu0 0.0
    %133 = vmatprep.subr.mxu0 0.0
    %134 = vmatpush2.msra.mxu0 0.0
    %135 = vmatprep.subr.mxu0 0.0
    %136 = vmatpush2.msra.mxu0 0.0
    %137 = vmatprep.subr.mxu0 0.0
    %138 = vmatpush2.msra.mxu0 0.0
    %139 = vmatprep.subr.mxu0 0.0
    %140 = vmatpush2.msra.mxu0 0.0
    %141 = vmatprep.subr.mxu0 0.0
    %142 = vmatpush2.msra.mxu0 0.0
    %143 = vmatprep.subr.mxu0 0.0
    %144 = vmatpush2.msra.mxu0 0.0
    %145 = vmatprep.subr.mxu0 0.0
    %146 = vmatpush2.msra.mxu0 0.0
    %147 = vmatprep.subr.mxu0 0.0
    %148 = vmatpush2.msra.mxu0 0.0
    %149 = vmatprep.subr.mxu0 0.0
    %150 = vmatpush2.msra.mxu0 0.0
    %151 = vmatprep.subr.mxu0 0.0
    %152 = vmatpush2.msra.mxu0 0.0
    %153 = vmatprep.subr.mxu0 0.0
    %154 = vmatpush2.msra.mxu0 0.0
    %155 = vmatprep.subr.mxu0 0.0
    %156 = vmatpush2.msra.mxu0 0.0
    %157 = vmatprep.subr.mxu0 0.0
    %158 = vmatpush2.msra.mxu0 0.0
    %159 = vmatprep.mubr.f32.mxu0 0.0
    %160 = vmatmul.mubr.f32.gmra.mxu0 %v86
    %v161 = vpop.f32.mrf.mxu0
    %v162 = vadd.f32 %v82, %v161
    %v163 = vpop.f32.mrf.mxu0
    %164 = vmatprep.mubr.f32.mxu0 0.0
    %165 = vmatmul.mubr.f32.gmra.mxu0 %v89
    %v166 = vpop.f32.mrf.mxu0
    %v167 = vadd.f32 %v82, %v166
    %v168 = vpop.f32.mrf.mxu0
    %169 = vdwg.mxu0
    %vm170 = vcmask 261120
    %v172 = vsel %vm170, 0.0, 0
    %174 = vmatprep.subr.mxu0 0.0
    %175 = vmatpush1.msra.mxu0 0.0
    %176 = vmatprep.subr.mxu0 0.0
    %177 = vmatpush1.msra.mxu0 0.0
    %178 = vmatprep.subr.mxu0 0.0
    %179 = vmatpush1.msra.mxu0 0.0
    %180 = vmatprep.subr.mxu0 0.0
    %181 = vmatpush1.msra.mxu0 0.0
    %182 = vmatprep.subr.mxu0 0.0
    %183 = vmatpush1.msra.mxu0 0.0
    %184 = vmatprep.subr.mxu0 0.0
    %185 = vmatpush1.msra.mxu0 0.0
    %186 = vmatprep.subr.mxu0 0.0
    %187 = vmatpush1.msra.mxu0 0.0
    %188 = vmatprep.subr.mxu0 0.0
    %189 = vmatpush1.msra.mxu0 0.0
    %190 = vmatprep.subr.mxu0 0.0
    %191 = vmatpush1.msra.mxu0 0.0
    %192 = vmatprep.subr.mxu0 0.0
    %193 = vmatpush1.msra.mxu0 0.0
    %194 = vmatprep.subr.mxu0 0.0
    %195 = vmatpush1.msra.mxu0 0.0
    %196 = vmatprep.subr.mxu0 0.0
    %197 = vmatpush1.msra.mxu0 0.0
    %198 = vmatprep.subr.mxu0 0.0
    %199 = vmatpush1.msra.mxu0 %v68
    %200 = vmatprep.subr.mxu0 0.0
    %201 = vmatpush1.msra.mxu0 %v67
    %202 = vmatprep.subr.mxu0 0.0
    %203 = vmatpush1.msra.mxu0 %v66
    %204 = vmatprep.subr.mxu0 0.0
    %205 = vmatpush1.msra.mxu0 %v65
    %206 = vmatprep.subr.mxu0 0.0
    %207 = vmatpush2.msra.mxu0 0.0
    %208 = vmatprep.subr.mxu0 0.0
    %209 = vmatpush2.msra.mxu0 0.0
    %210 = vmatprep.subr.mxu0 0.0
    %211 = vmatpush2.msra.mxu0 0.0
    %212 = vmatprep.subr.mxu0 0.0
    %213 = vmatpush2.msra.mxu0 0.0
    %214 = vmatprep.subr.mxu0 0.0
    %215 = vmatpush2.msra.mxu0 0.0
    %216 = vmatprep.subr.mxu0 0.0
    %217 = vmatpush2.msra.mxu0 0.0
    %218 = vmatprep.subr.mxu0 0.0
    %219 = vmatpush2.msra.mxu0 0.0
    %220 = vmatprep.subr.mxu0 0.0
    %221 = vmatpush2.msra.mxu0 0.0
    %222 = vmatprep.subr.mxu0 0.0
    %223 = vmatpush2.msra.mxu0 0.0
    %224 = vmatprep.subr.mxu0 0.0
    %225 = vmatpush2.msra.mxu0 0.0
    %226 = vmatprep.subr.mxu0 0.0
    %227 = vmatpush2.msra.mxu0 0.0
    %228 = vmatprep.subr.mxu0 0.0
    %229 = vmatpush2.msra.mxu0 0.0
    %230 = vmatprep.subr.mxu0 0.0
    %231 = vmatpush2.msra.mxu0 0.0
    %232 = vmatprep.subr.mxu0 0.0
    %233 = vmatpush2.msra.mxu0 0.0
    %234 = vmatprep.subr.mxu0 0.0
    %235 = vmatpush2.msra.mxu0 0.0
    %236 = vmatprep.subr.mxu0 0.0
    %237 = vmatpush2.msra.mxu0 0.0
    %238 = vmatprep.mubr.f32.mxu0 0.0
    %239 = vmatmul.mubr.f32.gmra.mxu0 %v172
    %v240 = vpop.f32.mrf.mxu0
    %v241 = vadd.f32 0.0, %v240
    %v242 = vpop.f32.mrf.mxu0
    %243 = vdwg.mxu0
    %v244 = vadd.f32 %v162, %v241
    %v246 = vlaneseq
    %v247 = vshrl.u32 %v246, 7
    %v248 = vsub.s32 0, %v247
    %v249 = vrot.slane %v73, %v248
    %v252 = vsel %vm170, %v244, 0
    %254 = vmatprep.subr.mxu0 0.0
    %255 = vmatpush1.msra.mxu0 0.0
    %256 = vmatprep.subr.mxu0 0.0
    %257 = vmatpush1.msra.mxu0 0.0
    %258 = vmatprep.subr.mxu0 0.0
    %259 = vmatpush1.msra.mxu0 0.0
    %260 = vmatprep.subr.mxu0 0.0
    %261 = vmatpush1.msra.mxu0 0.0
    %262 = vmatprep.subr.mxu0 0.0
    %263 = vmatpush1.msra.mxu0 0.0
    %264 = vmatprep.subr.mxu0 0.0
    %265 = vmatpush1.msra.mxu0 0.0
    %266 = vmatprep.subr.mxu0 0.0
    %267 = vmatpush1.msra.mxu0 0.0
    %268 = vmatprep.subr.mxu0 0.0
    %269 = vmatpush1.msra.mxu0 0.0
    %270 = vmatprep.subr.mxu0 0.0
    %271 = vmatpush1.msra.mxu0 0.0
    %272 = vmatprep.subr.mxu0 0.0
    %273 = vmatpush1.msra.mxu0 0.0
    %274 = vmatprep.subr.mxu0 0.0
    %275 = vmatpush1.msra.mxu0 0.0
    %276 = vmatprep.subr.mxu0 0.0
    %277 = vmatpush1.msra.mxu0 0.0
    %278 = vmatprep.subr.mxu0 0.0
    %279 = vmatpush1.msra.mxu0 %v72
    %280 = vmatprep.subr.mxu0 0.0
    %281 = vmatpush1.msra.mxu0 %v71
    %282 = vmatprep.subr.mxu0 0.0
    %283 = vmatpush1.msra.mxu0 %v70
    %284 = vmatprep.subr.mxu0 0.0
    %285 = vmatpush1.msra.mxu0 %v69
    %286 = vmatprep.subr.mxu0 0.0
    %287 = vmatpush2.msra.mxu0 0.0
    %288 = vmatprep.subr.mxu0 0.0
    %289 = vmatpush2.msra.mxu0 0.0
    %290 = vmatprep.subr.mxu0 0.0
    %291 = vmatpush2.msra.mxu0 0.0
    %292 = vmatprep.subr.mxu0 0.0
    %293 = vmatpush2.msra.mxu0 0.0
    %294 = vmatprep.subr.mxu0 0.0
    %295 = vmatpush2.msra.mxu0 0.0
    %296 = vmatprep.subr.mxu0 0.0
    %297 = vmatpush2.msra.mxu0 0.0
    %298 = vmatprep.subr.mxu0 0.0
    %299 = vmatpush2.msra.mxu0 0.0
    %300 = vmatprep.subr.mxu0 0.0
    %301 = vmatpush2.msra.mxu0 0.0
    %302 = vmatprep.subr.mxu0 0.0
    %303 = vmatpush2.msra.mxu0 0.0
    %304 = vmatprep.subr.mxu0 0.0
    %305 = vmatpush2.msra.mxu0 0.0
    %306 = vmatprep.subr.mxu0 0.0
    %307 = vmatpush2.msra.mxu0 0.0
    %308 = vmatprep.subr.mxu0 0.0
    %309 = vmatpush2.msra.mxu0 0.0
    %310 = vmatprep.subr.mxu0 0.0
    %311 = vmatpush2.msra.mxu0 0.0
    %312 = vmatprep.subr.mxu0 0.0
    %313 = vmatpush2.msra.mxu0 0.0
    %314 = vmatprep.subr.mxu0 0.0
    %315 = vmatpush2.msra.mxu0 0.0
    %316 = vmatprep.subr.mxu0 0.0
    %317 = vmatpush2.msra.mxu0 0.0
    %318 = vmatprep.mubr.f32.mxu0 0.0
    %319 = vmatmul.mubr.f32.gmra.mxu0 %v252
    %v320 = vpop.f32.mrf.mxu0
    %v321 = vadd.f32 %v249, %v320
    %v322 = vpop.f32.mrf.mxu0
    %323 = vdwg.mxu0
    %v324 = vmul.f32 %v321, 0.5
    %v325 = vtanh.pop %v324
    %v326 = vadd.f32 %v325, 1.0
    %v327 = vmul.f32 %v326, 0.5
    %v328 = vtanh.pop %v321
    %v329 = vmul.f32 %v327, 0.0
    %331 = vrot.lane.b32.xlu0 %v328, 64
    %v332 = vpop.permute.xlu0 %331
    %v334 = vmul.f32 %v327, %v332
    %336 = vrot.lane.b32.xlu0 %v334, 32
    %v337 = vpop.permute.xlu0 %336
    %v339 = vadd.f32 %v329, %v337
    %v340 = vtanh.pop %v339
    %342 = vrot.lane.b32.xlu0 %v340, 64
    %v343 = vpop.permute.xlu0 %342
    %v345 = vmul.f32 %v327, %v343
    %347 = vrot.lane.b32.xlu0 %v345, 32
    %v348 = vpop.permute.xlu0 %347
    %vm350 = vcmask 254976
    %351 = vst.msk [vmem:[#allocation8] sm:$0x3] %vm350, %v348
    %353 = vrot.lane.b32.xlu0 %v339, 96
    %v354 = vpop.permute.xlu0 %353
    %v355 = vsel %vm170, %v354, 0
    %357 = vmatprep.subr.mxu0 0.0
    %358 = vmatpush1.msra.mxu0 0.0
    %359 = vmatprep.subr.mxu0 0.0
    %360 = vmatpush1.msra.mxu0 0.0
    %361 = vmatprep.subr.mxu0 0.0
    %362 = vmatpush1.msra.mxu0 0.0
    %363 = vmatprep.subr.mxu0 0.0
    %364 = vmatpush1.msra.mxu0 0.0
    %365 = vmatprep.subr.mxu0 0.0
    %366 = vmatpush1.msra.mxu0 0.0
    %367 = vmatprep.subr.mxu0 0.0
    %368 = vmatpush1.msra.mxu0 0.0
    %369 = vmatprep.subr.mxu0 0.0
    %370 = vmatpush1.msra.mxu0 0.0
    %371 = vmatprep.subr.mxu0 0.0
    %372 = vmatpush1.msra.mxu0 0.0
    %373 = vmatprep.subr.mxu0 0.0
    %374 = vmatpush1.msra.mxu0 0.0
    %375 = vmatprep.subr.mxu0 0.0
    %376 = vmatpush1.msra.mxu0 0.0
    %377 = vmatprep.subr.mxu0 0.0
    %378 = vmatpush1.msra.mxu0 0.0
    %379 = vmatprep.subr.mxu0 0.0
    %380 = vmatpush1.msra.mxu0 0.0
    %381 = vmatprep.subr.mxu0 0.0
    %382 = vmatpush1.msra.mxu0 %v68
    %383 = vmatprep.subr.mxu0 0.0
    %384 = vmatpush1.msra.mxu0 %v67
    %385 = vmatprep.subr.mxu0 0.0
    %386 = vmatpush1.msra.mxu0 %v66
    %387 = vmatprep.subr.mxu0 0.0
    %388 = vmatpush1.msra.mxu0 %v65
    %389 = vmatprep.subr.mxu0 0.0
    %390 = vmatpush2.msra.mxu0 0.0
    %391 = vmatprep.subr.mxu0 0.0
    %392 = vmatpush2.msra.mxu0 0.0
    %393 = vmatprep.subr.mxu0 0.0
    %394 = vmatpush2.msra.mxu0 0.0
    %395 = vmatprep.subr.mxu0 0.0
    %396 = vmatpush2.msra.mxu0 0.0
    %397 = vmatprep.subr.mxu0 0.0
    %398 = vmatpush2.msra.mxu0 0.0
    %399 = vmatprep.subr.mxu0 0.0
    %400 = vmatpush2.msra.mxu0 0.0
    %401 = vmatprep.subr.mxu0 0.0
    %402 = vmatpush2.msra.mxu0 0.0
    %403 = vmatprep.subr.mxu0 0.0
    %404 = vmatpush2.msra.mxu0 0.0
    %405 = vmatprep.subr.mxu0 0.0
    %406 = vmatpush2.msra.mxu0 0.0
    %407 = vmatprep.subr.mxu0 0.0
    %408 = vmatpush2.msra.mxu0 0.0
    %409 = vmatprep.subr.mxu0 0.0
    %410 = vmatpush2.msra.mxu0 0.0
    %411 = vmatprep.subr.mxu0 0.0
    %412 = vmatpush2.msra.mxu0 0.0
    %413 = vmatprep.subr.mxu0 0.0
    %414 = vmatpush2.msra.mxu0 0.0
    %415 = vmatprep.subr.mxu0 0.0
    %416 = vmatpush2.msra.mxu0 0.0
    %417 = vmatprep.subr.mxu0 0.0
    %418 = vmatpush2.msra.mxu0 0.0
    %419 = vmatprep.subr.mxu0 0.0
    %420 = vmatpush2.msra.mxu0 0.0
    %421 = vmatprep.mubr.f32.mxu0 0.0
    %422 = vmatmul.mubr.f32.gmra.mxu0 %v355
    %v423 = vpop.f32.mrf.mxu0
    %v424 = vadd.f32 0.0, %v423
    %v425 = vpop.f32.mrf.mxu0
    %426 = vdwg.mxu0
    %v428 = vrot.slane %v424, 6
    %v430 = vadd.f32 %v162, %v428
    %v432 = vrot.slane %v430, 2
    %v433 = vsel %vm170, %v432, 0
    %435 = vmatprep.subr.mxu0 0.0
    %436 = vmatpush1.msra.mxu0 0.0
    %437 = vmatprep.subr.mxu0 0.0
    %438 = vmatpush1.msra.mxu0 0.0
    %439 = vmatprep.subr.mxu0 0.0
    %440 = vmatpush1.msra.mxu0 0.0
    %441 = vmatprep.subr.mxu0 0.0
    %442 = vmatpush1.msra.mxu0 0.0
    %443 = vmatprep.subr.mxu0 0.0
    %444 = vmatpush1.msra.mxu0 0.0
    %445 = vmatprep.subr.mxu0 0.0
    %446 = vmatpush1.msra.mxu0 0.0
    %447 = vmatprep.subr.mxu0 0.0
    %448 = vmatpush1.msra.mxu0 0.0
    %449 = vmatprep.subr.mxu0 0.0
    %450 = vmatpush1.msra.mxu0 0.0
    %451 = vmatprep.subr.mxu0 0.0
    %452 = vmatpush1.msra.mxu0 0.0
    %453 = vmatprep.subr.mxu0 0.0
    %454 = vmatpush1.msra.mxu0 0.0
    %455 = vmatprep.subr.mxu0 0.0
    %456 = vmatpush1.msra.mxu0 0.0
    %457 = vmatprep.subr.mxu0 0.0
    %458 = vmatpush1.msra.mxu0 0.0
    %459 = vmatprep.subr.mxu0 0.0
    %460 = vmatpush1.msra.mxu0 %v72
    %461 = vmatprep.subr.mxu0 0.0
    %462 = vmatpush1.msra.mxu0 %v71
    %463 = vmatprep.subr.mxu0 0.0
    %464 = vmatpush1.msra.mxu0 %v70
    %465 = vmatprep.subr.mxu0 0.0
    %466 = vmatpush1.msra.mxu0 %v69
    %467 = vmatprep.subr.mxu0 0.0
    %468 = vmatpush2.msra.mxu0 0.0
    %469 = vmatprep.subr.mxu0 0.0
    %470 = vmatpush2.msra.mxu0 0.0
    %471 = vmatprep.subr.mxu0 0.0
    %472 = vmatpush2.msra.mxu0 0.0
    %473 = vmatprep.subr.mxu0 0.0
    %474 = vmatpush2.msra.mxu0 0.0
    %475 = vmatprep.subr.mxu0 0.0
    %476 = vmatpush2.msra.mxu0 0.0
    %477 = vmatprep.subr.mxu0 0.0
    %478 = vmatpush2.msra.mxu0 0.0
    %479 = vmatprep.subr.mxu0 0.0
    %480 = vmatpush2.msra.mxu0 0.0
    %481 = vmatprep.subr.mxu0 0.0
    %482 = vmatpush2.msra.mxu0 0.0
    %483 = vmatprep.subr.mxu0 0.0
    %484 = vmatpush2.msra.mxu0 0.0
    %485 = vmatprep.subr.mxu0 0.0
    %486 = vmatpush2.msra.mxu0 0.0
    %487 = vmatprep.subr.mxu0 0.0
    %488 = vmatpush2.msra.mxu0 0.0
    %489 = vmatprep.subr.mxu0 0.0
    %490 = vmatpush2.msra.mxu0 0.0
    %491 = vmatprep.subr.mxu0 0.0
    %492 = vmatpush2.msra.mxu0 0.0
    %493 = vmatprep.subr.mxu0 0.0
    %494 = vmatpush2.msra.mxu0 0.0
    %495 = vmatprep.subr.mxu0 0.0
    %496 = vmatpush2.msra.mxu0 0.0
    %497 = vmatprep.subr.mxu0 0.0
    %498 = vmatpush2.msra.mxu0 0.0
    %499 = vmatprep.mubr.f32.mxu0 0.0
    %500 = vmatmul.mubr.f32.gmra.mxu0 %v433
    %v501 = vpop.f32.mrf.mxu0
    %v502 = vadd.f32 %v249, %v501
    %v503 = vpop.f32.mrf.mxu0
    %504 = vdwg.mxu0
    %v505 = vmul.f32 %v502, 0.5
    %v506 = vtanh.pop %v505
    %v507 = vadd.f32 %v506, 1.0
    %v508 = vmul.f32 %v507, 0.5
    %v509 = vtanh.pop %v502
    %v510 = vmul.f32 %v508, %v339
    %512 = vrot.lane.b32.xlu0 %v509, 64
    %v513 = vpop.permute.xlu0 %512
    %v515 = vmul.f32 %v508, %v513
    %517 = vrot.lane.b32.xlu0 %v515, 32
    %v518 = vpop.permute.xlu0 %517
    %v520 = vadd.f32 %v510, %v518
    %v521 = vtanh.pop %v520
    %523 = vrot.lane.b32.xlu0 %v521, 64
    %v524 = vpop.permute.xlu0 %523
    %v526 = vmul.f32 %v508, %v524
    %528 = vrot.lane.b32.xlu0 %v526, 32
    %v529 = vpop.permute.xlu0 %528
    %s531 = scalar_lea.vmem [#allocation8], 2
    %532 = vst.msk [vmem:[%s531] sm:$0x3] %vm350, %v529
    %534 = vrot.lane.b32.xlu0 %v520, 96
    %v535 = vpop.permute.xlu0 %534
    %v536 = vsel %vm170, %v535, 0
    %538 = vmatprep.subr.mxu0 0.0
    %539 = vmatpush1.msra.mxu0 0.0
    %540 = vmatprep.subr.mxu0 0.0
    %541 = vmatpush1.msra.mxu0 0.0
    %542 = vmatprep.subr.mxu0 0.0
    %543 = vmatpush1.msra.mxu0 0.0
    %544 = vmatprep.subr.mxu0 0.0
    %545 = vmatpush1.msra.mxu0 0.0
    %546 = vmatprep.subr.mxu0 0.0
    %547 = vmatpush1.msra.mxu0 0.0
    %548 = vmatprep.subr.mxu0 0.0
    %549 = vmatpush1.msra.mxu0 0.0
    %550 = vmatprep.subr.mxu0 0.0
    %551 = vmatpush1.msra.mxu0 0.0
    %552 = vmatprep.subr.mxu0 0.0
    %553 = vmatpush1.msra.mxu0 0.0
    %554 = vmatprep.subr.mxu0 0.0
    %555 = vmatpush1.msra.mxu0 0.0
    %556 = vmatprep.subr.mxu0 0.0
    %557 = vmatpush1.msra.mxu0 0.0
    %558 = vmatprep.subr.mxu0 0.0
    %559 = vmatpush1.msra.mxu0 0.0
    %560 = vmatprep.subr.mxu0 0.0
    %561 = vmatpush1.msra.mxu0 0.0
    %562 = vmatprep.subr.mxu0 0.0
    %563 = vmatpush1.msra.mxu0 %v68
    %564 = vmatprep.subr.mxu0 0.0
    %565 = vmatpush1.msra.mxu0 %v67
    %566 = vmatprep.subr.mxu0 0.0
    %567 = vmatpush1.msra.mxu0 %v66
    %568 = vmatprep.subr.mxu0 0.0
    %569 = vmatpush1.msra.mxu0 %v65
    %570 = vmatprep.subr.mxu0 0.0
    %571 = vmatpush2.msra.mxu0 0.0
    %572 = vmatprep.subr.mxu0 0.0
    %573 = vmatpush2.msra.mxu0 0.0
    %574 = vmatprep.subr.mxu0 0.0
    %575 = vmatpush2.msra.mxu0 0.0
    %576 = vmatprep.subr.mxu0 0.0
    %577 = vmatpush2.msra.mxu0 0.0
    %578 = vmatprep.subr.mxu0 0.0
    %579 = vmatpush2.msra.mxu0 0.0
    %580 = vmatprep.subr.mxu0 0.0
    %581 = vmatpush2.msra.mxu0 0.0
    %582 = vmatprep.subr.mxu0 0.0
    %583 = vmatpush2.msra.mxu0 0.0
    %584 = vmatprep.subr.mxu0 0.0
    %585 = vmatpush2.msra.mxu0 0.0
    %586 = vmatprep.subr.mxu0 0.0
    %587 = vmatpush2.msra.mxu0 0.0
    %588 = vmatprep.subr.mxu0 0.0
    %589 = vmatpush2.msra.mxu0 0.0
    %590 = vmatprep.subr.mxu0 0.0
    %591 = vmatpush2.msra.mxu0 0.0
    %592 = vmatprep.subr.mxu0 0.0
    %593 = vmatpush2.msra.mxu0 0.0
    %594 = vmatprep.subr.mxu0 0.0
    %595 = vmatpush2.msra.mxu0 0.0
    %596 = vmatprep.subr.mxu0 0.0
    %597 = vmatpush2.msra.mxu0 0.0
    %598 = vmatprep.subr.mxu0 0.0
    %599 = vmatpush2.msra.mxu0 0.0
    %600 = vmatprep.subr.mxu0 0.0
    %601 = vmatpush2.msra.mxu0 0.0
    %602 = vmatprep.mubr.f32.mxu0 0.0
    %603 = vmatmul.mubr.f32.gmra.mxu0 %v536
    %v604 = vpop.f32.mrf.mxu0
    %v605 = vadd.f32 0.0, %v604
    %v606 = vpop.f32.mrf.mxu0
    %607 = vdwg.mxu0
    %v609 = vrot.slane %v605, 4
    %v611 = vadd.f32 %v162, %v609
    %v613 = vrot.slane %v611, 4
    %v614 = vsel %vm170, %v613, 0
    %616 = vmatprep.subr.mxu0 0.0
    %617 = vmatpush1.msra.mxu0 0.0
    %618 = vmatprep.subr.mxu0 0.0
    %619 = vmatpush1.msra.mxu0 0.0
    %620 = vmatprep.subr.mxu0 0.0
    %621 = vmatpush1.msra.mxu0 0.0
    %622 = vmatprep.subr.mxu0 0.0
    %623 = vmatpush1.msra.mxu0 0.0
    %624 = vmatprep.subr.mxu0 0.0
    %625 = vmatpush1.msra.mxu0 0.0
    %626 = vmatprep.subr.mxu0 0.0
    %627 = vmatpush1.msra.mxu0 0.0
    %628 = vmatprep.subr.mxu0 0.0
    %629 = vmatpush1.msra.mxu0 0.0
    %630 = vmatprep.subr.mxu0 0.0
    %631 = vmatpush1.msra.mxu0 0.0
    %632 = vmatprep.subr.mxu0 0.0
    %633 = vmatpush1.msra.mxu0 0.0
    %634 = vmatprep.subr.mxu0 0.0
    %635 = vmatpush1.msra.mxu0 0.0
    %636 = vmatprep.subr.mxu0 0.0
    %637 = vmatpush1.msra.mxu0 0.0
    %638 = vmatprep.subr.mxu0 0.0
    %639 = vmatpush1.msra.mxu0 0.0
    %640 = vmatprep.subr.mxu0 0.0
    %641 = vmatpush1.msra.mxu0 %v72
    %642 = vmatprep.subr.mxu0 0.0
    %643 = vmatpush1.msra.mxu0 %v71
    %644 = vmatprep.subr.mxu0 0.0
    %645 = vmatpush1.msra.mxu0 %v70
    %646 = vmatprep.subr.mxu0 0.0
    %647 = vmatpush1.msra.mxu0 %v69
    %648 = vmatprep.subr.mxu0 0.0
    %649 = vmatpush2.msra.mxu0 0.0
    %650 = vmatprep.subr.mxu0 0.0
    %651 = vmatpush2.msra.mxu0 0.0
    %652 = vmatprep.subr.mxu0 0.0
    %653 = vmatpush2.msra.mxu0 0.0
    %654 = vmatprep.subr.mxu0 0.0
    %655 = vmatpush2.msra.mxu0 0.0
    %656 = vmatprep.subr.mxu0 0.0
    %657 = vmatpush2.msra.mxu0 0.0
    %658 = vmatprep.subr.mxu0 0.0
    %659 = vmatpush2.msra.mxu0 0.0
    %660 = vmatprep.subr.mxu0 0.0
    %661 = vmatpush2.msra.mxu0 0.0
    %662 = vmatprep.subr.mxu0 0.0
    %663 = vmatpush2.msra.mxu0 0.0
    %664 = vmatprep.subr.mxu0 0.0
    %665 = vmatpush2.msra.mxu0 0.0
    %666 = vmatprep.subr.mxu0 0.0
    %667 = vmatpush2.msra.mxu0 0.0
    %668 = vmatprep.subr.mxu0 0.0
    %669 = vmatpush2.msra.mxu0 0.0
    %670 = vmatprep.subr.mxu0 0.0
    %671 = vmatpush2.msra.mxu0 0.0
    %672 = vmatprep.subr.mxu0 0.0
    %673 = vmatpush2.msra.mxu0 0.0
    %674 = vmatprep.subr.mxu0 0.0
    %675 = vmatpush2.msra.mxu0 0.0
    %676 = vmatprep.subr.mxu0 0.0
    %677 = vmatpush2.msra.mxu0 0.0
    %678 = vmatprep.subr.mxu0 0.0
    %679 = vmatpush2.msra.mxu0 0.0
    %680 = vmatprep.mubr.f32.mxu0 0.0
    %681 = vmatmul.mubr.f32.gmra.mxu0 %v614
    %v682 = vpop.f32.mrf.mxu0
    %v683 = vadd.f32 %v249, %v682
    %v684 = vpop.f32.mrf.mxu0
    %685 = vdwg.mxu0
    %v686 = vmul.f32 %v683, 0.5
    %v687 = vtanh.pop %v686
    %v688 = vadd.f32 %v687, 1.0
    %v689 = vmul.f32 %v688, 0.5
    %v690 = vtanh.pop %v683
    %v691 = vmul.f32 %v689, %v520
    %693 = vrot.lane.b32.xlu0 %v690, 64
    %v694 = vpop.permute.xlu0 %693
    %v696 = vmul.f32 %v689, %v694
    %698 = vrot.lane.b32.xlu0 %v696, 32
    %v699 = vpop.permute.xlu0 %698
    %v701 = vadd.f32 %v691, %v699
    %v702 = vtanh.pop %v701
    %704 = vrot.lane.b32.xlu0 %v702, 64
    %v705 = vpop.permute.xlu0 %704
    %v707 = vmul.f32 %v689, %v705
    %709 = vrot.lane.b32.xlu0 %v707, 32
    %v710 = vpop.permute.xlu0 %709
    %s712 = scalar_lea.vmem [#allocation8], 4
    %713 = vst.msk [vmem:[%s712] sm:$0x3] %vm350, %v710
    %715 = vrot.lane.b32.xlu0 %v701, 96
    %v716 = vpop.permute.xlu0 %715
    %v717 = vsel %vm170, %v716, 0
    %719 = vmatprep.subr.mxu0 0.0
    %720 = vmatpush1.msra.mxu0 0.0
    %721 = vmatprep.subr.mxu0 0.0
    %722 = vmatpush1.msra.mxu0 0.0
    %723 = vmatprep.subr.mxu0 0.0
    %724 = vmatpush1.msra.mxu0 0.0
    %725 = vmatprep.subr.mxu0 0.0
    %726 = vmatpush1.msra.mxu0 0.0
    %727 = vmatprep.subr.mxu0 0.0
    %728 = vmatpush1.msra.mxu0 0.0
    %729 = vmatprep.subr.mxu0 0.0
    %730 = vmatpush1.msra.mxu0 0.0
    %731 = vmatprep.subr.mxu0 0.0
    %732 = vmatpush1.msra.mxu0 0.0
    %733 = vmatprep.subr.mxu0 0.0
    %734 = vmatpush1.msra.mxu0 0.0
    %735 = vmatprep.subr.mxu0 0.0
    %736 = vmatpush1.msra.mxu0 0.0
    %737 = vmatprep.subr.mxu0 0.0
    %738 = vmatpush1.msra.mxu0 0.0
    %739 = vmatprep.subr.mxu0 0.0
    %740 = vmatpush1.msra.mxu0 0.0
    %741 = vmatprep.subr.mxu0 0.0
    %742 = vmatpush1.msra.mxu0 0.0
    %743 = vmatprep.subr.mxu0 0.0
    %744 = vmatpush1.msra.mxu0 %v68
    %745 = vmatprep.subr.mxu0 0.0
    %746 = vmatpush1.msra.mxu0 %v67
    %747 = vmatprep.subr.mxu0 0.0
    %748 = vmatpush1.msra.mxu0 %v66
    %749 = vmatprep.subr.mxu0 0.0
    %750 = vmatpush1.msra.mxu0 %v65
    %751 = vmatprep.subr.mxu0 0.0
    %752 = vmatpush2.msra.mxu0 0.0
    %753 = vmatprep.subr.mxu0 0.0
    %754 = vmatpush2.msra.mxu0 0.0
    %755 = vmatprep.subr.mxu0 0.0
    %756 = vmatpush2.msra.mxu0 0.0
    %757 = vmatprep.subr.mxu0 0.0
    %758 = vmatpush2.msra.mxu0 0.0
    %759 = vmatprep.subr.mxu0 0.0
    %760 = vmatpush2.msra.mxu0 0.0
    %761 = vmatprep.subr.mxu0 0.0
    %762 = vmatpush2.msra.mxu0 0.0
    %763 = vmatprep.subr.mxu0 0.0
    %764 = vmatpush2.msra.mxu0 0.0
    %765 = vmatprep.subr.mxu0 0.0
    %766 = vmatpush2.msra.mxu0 0.0
    %767 = vmatprep.subr.mxu0 0.0
    %768 = vmatpush2.msra.mxu0 0.0
    %769 = vmatprep.subr.mxu0 0.0
    %770 = vmatpush2.msra.mxu0 0.0
    %771 = vmatprep.subr.mxu0 0.0
    %772 = vmatpush2.msra.mxu0 0.0
    %773 = vmatprep.subr.mxu0 0.0
    %774 = vmatpush2.msra.mxu0 0.0
    %775 = vmatprep.subr.mxu0 0.0
    %776 = vmatpush2.msra.mxu0 0.0
    %777 = vmatprep.subr.mxu0 0.0
    %778 = vmatpush2.msra.mxu0 0.0
    %779 = vmatprep.subr.mxu0 0.0
    %780 = vmatpush2.msra.mxu0 0.0
    %781 = vmatprep.subr.mxu0 0.0
    %782 = vmatpush2.msra.mxu0 0.0
    %783 = vmatprep.mubr.f32.mxu0 0.0
    %784 = vmatmul.mubr.f32.gmra.mxu0 %v717
    %v785 = vpop.f32.mrf.mxu0
    %v786 = vadd.f32 0.0, %v785
    %v787 = vpop.f32.mrf.mxu0
    %788 = vdwg.mxu0
    %v790 = vrot.slane %v786, 2
    %v792 = vadd.f32 %v162, %v790
    %v794 = vrot.slane %v792, 6
    %v795 = vsel %vm170, %v794, 0
    %797 = vmatprep.subr.mxu0 0.0
    %798 = vmatpush1.msra.mxu0 0.0
    %799 = vmatprep.subr.mxu0 0.0
    %800 = vmatpush1.msra.mxu0 0.0
    %801 = vmatprep.subr.mxu0 0.0
    %802 = vmatpush1.msra.mxu0 0.0
    %803 = vmatprep.subr.mxu0 0.0
    %804 = vmatpush1.msra.mxu0 0.0
    %805 = vmatprep.subr.mxu0 0.0
    %806 = vmatpush1.msra.mxu0 0.0
    %807 = vmatprep.subr.mxu0 0.0
    %808 = vmatpush1.msra.mxu0 0.0
    %809 = vmatprep.subr.mxu0 0.0
    %810 = vmatpush1.msra.mxu0 0.0
    %811 = vmatprep.subr.mxu0 0.0
    %812 = vmatpush1.msra.mxu0 0.0
    %813 = vmatprep.subr.mxu0 0.0
    %814 = vmatpush1.msra.mxu0 0.0
    %815 = vmatprep.subr.mxu0 0.0
    %816 = vmatpush1.msra.mxu0 0.0
    %817 = vmatprep.subr.mxu0 0.0
    %818 = vmatpush1.msra.mxu0 0.0
    %819 = vmatprep.subr.mxu0 0.0
    %820 = vmatpush1.msra.mxu0 0.0
    %821 = vmatprep.subr.mxu0 0.0
    %822 = vmatpush1.msra.mxu0 %v72
    %823 = vmatprep.subr.mxu0 0.0
    %824 = vmatpush1.msra.mxu0 %v71
    %825 = vmatprep.subr.mxu0 0.0
    %826 = vmatpush1.msra.mxu0 %v70
    %827 = vmatprep.subr.mxu0 0.0
    %828 = vmatpush1.msra.mxu0 %v69
    %829 = vmatprep.subr.mxu0 0.0
    %830 = vmatpush2.msra.mxu0 0.0
    %831 = vmatprep.subr.mxu0 0.0
    %832 = vmatpush2.msra.mxu0 0.0
    %833 = vmatprep.subr.mxu0 0.0
    %834 = vmatpush2.msra.mxu0 0.0
    %835 = vmatprep.subr.mxu0 0.0
    %836 = vmatpush2.msra.mxu0 0.0
    %837 = vmatprep.subr.mxu0 0.0
    %838 = vmatpush2.msra.mxu0 0.0
    %839 = vmatprep.subr.mxu0 0.0
    %840 = vmatpush2.msra.mxu0 0.0
    %841 = vmatprep.subr.mxu0 0.0
    %842 = vmatpush2.msra.mxu0 0.0
    %843 = vmatprep.subr.mxu0 0.0
    %844 = vmatpush2.msra.mxu0 0.0
    %845 = vmatprep.subr.mxu0 0.0
    %846 = vmatpush2.msra.mxu0 0.0
    %847 = vmatprep.subr.mxu0 0.0
    %848 = vmatpush2.msra.mxu0 0.0
    %849 = vmatprep.subr.mxu0 0.0
    %850 = vmatpush2.msra.mxu0 0.0
    %851 = vmatprep.subr.mxu0 0.0
    %852 = vmatpush2.msra.mxu0 0.0
    %853 = vmatprep.subr.mxu0 0.0
    %854 = vmatpush2.msra.mxu0 0.0
    %855 = vmatprep.subr.mxu0 0.0
    %856 = vmatpush2.msra.mxu0 0.0
    %857 = vmatprep.subr.mxu0 0.0
    %858 = vmatpush2.msra.mxu0 0.0
    %859 = vmatprep.subr.mxu0 0.0
    %860 = vmatpush2.msra.mxu0 0.0
    %861 = vmatprep.mubr.f32.mxu0 0.0
    %862 = vmatmul.mubr.f32.gmra.mxu0 %v795
    %v863 = vpop.f32.mrf.mxu0
    %v864 = vadd.f32 %v249, %v863
    %v865 = vpop.f32.mrf.mxu0
    %866 = vdwg.mxu0
    %v867 = vmul.f32 %v864, 0.5
    %v868 = vtanh.pop %v867
    %v869 = vadd.f32 %v868, 1.0
    %v870 = vmul.f32 %v869, 0.5
    %v871 = vtanh.pop %v864
    %v872 = vmul.f32 %v870, %v701
    %874 = vrot.lane.b32.xlu0 %v871, 64
    %v875 = vpop.permute.xlu0 %874
    %v877 = vmul.f32 %v870, %v875
    %879 = vrot.lane.b32.xlu0 %v877, 32
    %v880 = vpop.permute.xlu0 %879
    %v882 = vadd.f32 %v872, %v880
    %v883 = vtanh.pop %v882
    %885 = vrot.lane.b32.xlu0 %v883, 64
    %v886 = vpop.permute.xlu0 %885
    %v888 = vmul.f32 %v870, %v886
    %890 = vrot.lane.b32.xlu0 %v888, 32
    %v891 = vpop.permute.xlu0 %890
    %s893 = scalar_lea.vmem [#allocation8], 6
    %894 = vst.msk [vmem:[%s893] sm:$0x3] %vm350, %v891
    %896 = vrot.lane.b32.xlu0 %v882, 96
    %v897 = vpop.permute.xlu0 %896
    %v898 = vsel %vm170, %v897, 0
    %900 = vmatprep.subr.mxu0 0.0
    %901 = vmatpush1.msra.mxu0 0.0
    %902 = vmatprep.subr.mxu0 0.0
    %903 = vmatpush1.msra.mxu0 0.0
    %904 = vmatprep.subr.mxu0 0.0
    %905 = vmatpush1.msra.mxu0 0.0
    %906 = vmatprep.subr.mxu0 0.0
    %907 = vmatpush1.msra.mxu0 0.0
    %908 = vmatprep.subr.mxu0 0.0
    %909 = vmatpush1.msra.mxu0 0.0
    %910 = vmatprep.subr.mxu0 0.0
    %911 = vmatpush1.msra.mxu0 0.0
    %912 = vmatprep.subr.mxu0 0.0
    %913 = vmatpush1.msra.mxu0 0.0
    %914 = vmatprep.subr.mxu0 0.0
    %915 = vmatpush1.msra.mxu0 0.0
    %916 = vmatprep.subr.mxu0 0.0
    %917 = vmatpush1.msra.mxu0 0.0
    %918 = vmatprep.subr.mxu0 0.0
    %919 = vmatpush1.msra.mxu0 0.0
    %920 = vmatprep.subr.mxu0 0.0
    %921 = vmatpush1.msra.mxu0 0.0
    %922 = vmatprep.subr.mxu0 0.0
    %923 = vmatpush1.msra.mxu0 0.0
    %924 = vmatprep.subr.mxu0 0.0
    %925 = vmatpush1.msra.mxu0 %v68
    %926 = vmatprep.subr.mxu0 0.0
    %927 = vmatpush1.msra.mxu0 %v67
    %928 = vmatprep.subr.mxu0 0.0
    %929 = vmatpush1.msra.mxu0 %v66
    %930 = vmatprep.subr.mxu0 0.0
    %931 = vmatpush1.msra.mxu0 %v65
    %932 = vmatprep.subr.mxu0 0.0
    %933 = vmatpush2.msra.mxu0 0.0
    %934 = vmatprep.subr.mxu0 0.0
    %935 = vmatpush2.msra.mxu0 0.0
    %936 = vmatprep.subr.mxu0 0.0
    %937 = vmatpush2.msra.mxu0 0.0
    %938 = vmatprep.subr.mxu0 0.0
    %939 = vmatpush2.msra.mxu0 0.0
    %940 = vmatprep.subr.mxu0 0.0
    %941 = vmatpush2.msra.mxu0 0.0
    %942 = vmatprep.subr.mxu0 0.0
    %943 = vmatpush2.msra.mxu0 0.0
    %944 = vmatprep.subr.mxu0 0.0
    %945 = vmatpush2.msra.mxu0 0.0
    %946 = vmatprep.subr.mxu0 0.0
    %947 = vmatpush2.msra.mxu0 0.0
    %948 = vmatprep.subr.mxu0 0.0
    %949 = vmatpush2.msra.mxu0 0.0
    %950 = vmatprep.subr.mxu0 0.0
    %951 = vmatpush2.msra.mxu0 0.0
    %952 = vmatprep.subr.mxu0 0.0
    %953 = vmatpush2.msra.mxu0 0.0
    %954 = vmatprep.subr.mxu0 0.0
    %955 = vmatpush2.msra.mxu0 0.0
    %956 = vmatprep.subr.mxu0 0.0
    %957 = vmatpush2.msra.mxu0 0.0
    %958 = vmatprep.subr.mxu0 0.0
    %959 = vmatpush2.msra.mxu0 0.0
    %960 = vmatprep.subr.mxu0 0.0
    %961 = vmatpush2.msra.mxu0 0.0
    %962 = vmatprep.subr.mxu0 0.0
    %963 = vmatpush2.msra.mxu0 0.0
    %964 = vmatprep.mubr.f32.mxu0 0.0
    %965 = vmatmul.mubr.f32.gmra.mxu0 %v898
    %v966 = vpop.f32.mrf.mxu0
    %v967 = vadd.f32 0.0, %v966
    %v968 = vpop.f32.mrf.mxu0
    %969 = vdwg.mxu0
    %v970 = vadd.f32 %v167, %v967
    %v972 = vsel %vm170, %v970, 0
    %974 = vmatprep.subr.mxu0 0.0
    %975 = vmatpush1.msra.mxu0 0.0
    %976 = vmatprep.subr.mxu0 0.0
    %977 = vmatpush1.msra.mxu0 0.0
    %978 = vmatprep.subr.mxu0 0.0
    %979 = vmatpush1.msra.mxu0 0.0
    %980 = vmatprep.subr.mxu0 0.0
    %981 = vmatpush1.msra.mxu0 0.0
    %982 = vmatprep.subr.mxu0 0.0
    %983 = vmatpush1.msra.mxu0 0.0
    %984 = vmatprep.subr.mxu0 0.0
    %985 = vmatpush1.msra.mxu0 0.0
    %986 = vmatprep.subr.mxu0 0.0
    %987 = vmatpush1.msra.mxu0 0.0
    %988 = vmatprep.subr.mxu0 0.0
    %989 = vmatpush1.msra.mxu0 0.0
    %990 = vmatprep.subr.mxu0 0.0
    %991 = vmatpush1.msra.mxu0 0.0
    %992 = vmatprep.subr.mxu0 0.0
    %993 = vmatpush1.msra.mxu0 0.0
    %994 = vmatprep.subr.mxu0 0.0
    %995 = vmatpush1.msra.mxu0 0.0
    %996 = vmatprep.subr.mxu0 0.0
    %997 = vmatpush1.msra.mxu0 0.0
    %998 = vmatprep.subr.mxu0 0.0
    %999 = vmatpush1.msra.mxu0 %v72
    %1000 = vmatprep.subr.mxu0 0.0
    %1001 = vmatpush1.msra.mxu0 %v71
    %1002 = vmatprep.subr.mxu0 0.0
    %1003 = vmatpush1.msra.mxu0 %v70
    %1004 = vmatprep.subr.mxu0 0.0
    %1005 = vmatpush1.msra.mxu0 %v69
    %1006 = vmatprep.subr.mxu0 0.0
    %1007 = vmatpush2.msra.mxu0 0.0
    %1008 = vmatprep.subr.mxu0 0.0
    %1009 = vmatpush2.msra.mxu0 0.0
    %1010 = vmatprep.subr.mxu0 0.0
    %1011 = vmatpush2.msra.mxu0 0.0
    %1012 = vmatprep.subr.mxu0 0.0
    %1013 = vmatpush2.msra.mxu0 0.0
    %1014 = vmatprep.subr.mxu0 0.0
    %1015 = vmatpush2.msra.mxu0 0.0
    %1016 = vmatprep.subr.mxu0 0.0
    %1017 = vmatpush2.msra.mxu0 0.0
    %1018 = vmatprep.subr.mxu0 0.0
    %1019 = vmatpush2.msra.mxu0 0.0
    %1020 = vmatprep.subr.mxu0 0.0
    %1021 = vmatpush2.msra.mxu0 0.0
    %1022 = vmatprep.subr.mxu0 0.0
    %1023 = vmatpush2.msra.mxu0 0.0
    %1024 = vmatprep.subr.mxu0 0.0
    %1025 = vmatpush2.msra.mxu0 0.0
    %1026 = vmatprep.subr.mxu0 0.0
    %1027 = vmatpush2.msra.mxu0 0.0
    %1028 = vmatprep.subr.mxu0 0.0
    %1029 = vmatpush2.msra.mxu0 0.0
    %1030 = vmatprep.subr.mxu0 0.0
    %1031 = vmatpush2.msra.mxu0 0.0
    %1032 = vmatprep.subr.mxu0 0.0
    %1033 = vmatpush2.msra.mxu0 0.0
    %1034 = vmatprep.subr.mxu0 0.0
    %1035 = vmatpush2.msra.mxu0 0.0
    %1036 = vmatprep.subr.mxu0 0.0
    %1037 = vmatpush2.msra.mxu0 0.0
    %1038 = vmatprep.mubr.f32.mxu0 0.0
    %1039 = vmatmul.mubr.f32.gmra.mxu0 %v972
    %v1040 = vpop.f32.mrf.mxu0
    %v1041 = vadd.f32 %v249, %v1040
    %v1042 = vpop.f32.mrf.mxu0
    %1043 = vdwg.mxu0
    %v1044 = vmul.f32 %v1041, 0.5
    %v1045 = vtanh.pop %v1044
    %v1046 = vadd.f32 %v1045, 1.0
    %v1047 = vmul.f32 %v1046, 0.5
    %v1048 = vtanh.pop %v1041
    %v1049 = vmul.f32 %v1047, %v882
    %1051 = vrot.lane.b32.xlu0 %v1048, 64
    %v1052 = vpop.permute.xlu0 %1051
    %v1054 = vmul.f32 %v1047, %v1052
    %1056 = vrot.lane.b32.xlu0 %v1054, 32
    %v1057 = vpop.permute.xlu0 %1056
    %v1059 = vadd.f32 %v1049, %v1057
    %v1060 = vtanh.pop %v1059
    %1062 = vrot.lane.b32.xlu0 %v1060, 64
    %v1063 = vpop.permute.xlu0 %1062
    %v1065 = vmul.f32 %v1047, %v1063
    %1067 = vrot.lane.b32.xlu0 %v1065, 32
    %v1068 = vpop.permute.xlu0 %1067
    %s1070 = scalar_lea.vmem [#allocation8], 8
    %1071 = vst.msk [vmem:[%s1070] sm:$0x3] %vm350, %v1068
    %1073 = vrot.lane.b32.xlu0 %v1059, 96
    %v1074 = vpop.permute.xlu0 %1073
    %v1075 = vsel %vm170, %v1074, 0
    %1077 = vmatprep.subr.mxu0 0.0
    %1078 = vmatpush1.msra.mxu0 0.0
    %1079 = vmatprep.subr.mxu0 0.0
    %1080 = vmatpush1.msra.mxu0 0.0
    %1081 = vmatprep.subr.mxu0 0.0
    %1082 = vmatpush1.msra.mxu0 0.0
    %1083 = vmatprep.subr.mxu0 0.0
    %1084 = vmatpush1.msra.mxu0 0.0
    %1085 = vmatprep.subr.mxu0 0.0
    %1086 = vmatpush1.msra.mxu0 0.0
    %1087 = vmatprep.subr.mxu0 0.0
    %1088 = vmatpush1.msra.mxu0 0.0
    %1089 = vmatprep.subr.mxu0 0.0
    %1090 = vmatpush1.msra.mxu0 0.0
    %1091 = vmatprep.subr.mxu0 0.0
    %1092 = vmatpush1.msra.mxu0 0.0
    %1093 = vmatprep.subr.mxu0 0.0
    %1094 = vmatpush1.msra.mxu0 0.0
    %1095 = vmatprep.subr.mxu0 0.0
    %1096 = vmatpush1.msra.mxu0 0.0
    %1097 = vmatprep.subr.mxu0 0.0
    %1098 = vmatpush1.msra.mxu0 0.0
    %1099 = vmatprep.subr.mxu0 0.0
    %1100 = vmatpush1.msra.mxu0 0.0
    %1101 = vmatprep.subr.mxu0 0.0
    %1102 = vmatpush1.msra.mxu0 %v68
    %1103 = vmatprep.subr.mxu0 0.0
    %1104 = vmatpush1.msra.mxu0 %v67
    %1105 = vmatprep.subr.mxu0 0.0
    %1106 = vmatpush1.msra.mxu0 %v66
    %1107 = vmatprep.subr.mxu0 0.0
    %1108 = vmatpush1.msra.mxu0 %v65
    %1109 = vmatprep.subr.mxu0 0.0
    %1110 = vmatpush2.msra.mxu0 0.0
    %1111 = vmatprep.subr.mxu0 0.0
    %1112 = vmatpush2.msra.mxu0 0.0
    %1113 = vmatprep.subr.mxu0 0.0
    %1114 = vmatpush2.msra.mxu0 0.0
    %1115 = vmatprep.subr.mxu0 0.0
    %1116 = vmatpush2.msra.mxu0 0.0
    %1117 = vmatprep.subr.mxu0 0.0
    %1118 = vmatpush2.msra.mxu0 0.0
    %1119 = vmatprep.subr.mxu0 0.0
    %1120 = vmatpush2.msra.mxu0 0.0
    %1121 = vmatprep.subr.mxu0 0.0
    %1122 = vmatpush2.msra.mxu0 0.0
    %1123 = vmatprep.subr.mxu0 0.0
    %1124 = vmatpush2.msra.mxu0 0.0
    %1125 = vmatprep.subr.mxu0 0.0
    %1126 = vmatpush2.msra.mxu0 0.0
    %1127 = vmatprep.subr.mxu0 0.0
    %1128 = vmatpush2.msra.mxu0 0.0
    %1129 = vmatprep.subr.mxu0 0.0
    %1130 = vmatpush2.msra.mxu0 0.0
    %1131 = vmatprep.subr.mxu0 0.0
    %1132 = vmatpush2.msra.mxu0 0.0
    %1133 = vmatprep.subr.mxu0 0.0
    %1134 = vmatpush2.msra.mxu0 0.0
    %1135 = vmatprep.subr.mxu0 0.0
    %1136 = vmatpush2.msra.mxu0 0.0
    %1137 = vmatprep.subr.mxu0 0.0
    %1138 = vmatpush2.msra.mxu0 0.0
    %1139 = vmatprep.subr.mxu0 0.0
    %1140 = vmatpush2.msra.mxu0 0.0
    %1141 = vmatprep.mubr.f32.mxu0 0.0
    %1142 = vmatmul.mubr.f32.gmra.mxu0 %v1075
    %v1143 = vpop.f32.mrf.mxu0
    %v1144 = vadd.f32 0.0, %v1143
    %v1145 = vpop.f32.mrf.mxu0
    %1146 = vdwg.mxu0
    %v1148 = vrot.slane %v1144, 6
    %v1150 = vadd.f32 %v167, %v1148
    %v1152 = vrot.slane %v1150, 2
    %v1153 = vsel %vm170, %v1152, 0
    %1155 = vmatprep.subr.mxu0 0.0
    %1156 = vmatpush1.msra.mxu0 0.0
    %1157 = vmatprep.subr.mxu0 0.0
    %1158 = vmatpush1.msra.mxu0 0.0
    %1159 = vmatprep.subr.mxu0 0.0
    %1160 = vmatpush1.msra.mxu0 0.0
    %1161 = vmatprep.subr.mxu0 0.0
    %1162 = vmatpush1.msra.mxu0 0.0
    %1163 = vmatprep.subr.mxu0 0.0
    %1164 = vmatpush1.msra.mxu0 0.0
    %1165 = vmatprep.subr.mxu0 0.0
    %1166 = vmatpush1.msra.mxu0 0.0
    %1167 = vmatprep.subr.mxu0 0.0
    %1168 = vmatpush1.msra.mxu0 0.0
    %1169 = vmatprep.subr.mxu0 0.0
    %1170 = vmatpush1.msra.mxu0 0.0
    %1171 = vmatprep.subr.mxu0 0.0
    %1172 = vmatpush1.msra.mxu0 0.0
    %1173 = vmatprep.subr.mxu0 0.0
    %1174 = vmatpush1.msra.mxu0 0.0
    %1175 = vmatprep.subr.mxu0 0.0
    %1176 = vmatpush1.msra.mxu0 0.0
    %1177 = vmatprep.subr.mxu0 0.0
    %1178 = vmatpush1.msra.mxu0 0.0
    %1179 = vmatprep.subr.mxu0 0.0
    %1180 = vmatpush1.msra.mxu0 %v72
    %1181 = vmatprep.subr.mxu0 0.0
    %1182 = vmatpush1.msra.mxu0 %v71
    %1183 = vmatprep.subr.mxu0 0.0
    %1184 = vmatpush1.msra.mxu0 %v70
    %1185 = vmatprep.subr.mxu0 0.0
    %1186 = vmatpush1.msra.mxu0 %v69
    %1187 = vmatprep.subr.mxu0 0.0
    %1188 = vmatpush2.msra.mxu0 0.0
    %1189 = vmatprep.subr.mxu0 0.0
    %1190 = vmatpush2.msra.mxu0 0.0
    %1191 = vmatprep.subr.mxu0 0.0
    %1192 = vmatpush2.msra.mxu0 0.0
    %1193 = vmatprep.subr.mxu0 0.0
    %1194 = vmatpush2.msra.mxu0 0.0
    %1195 = vmatprep.subr.mxu0 0.0
    %1196 = vmatpush2.msra.mxu0 0.0
    %1197 = vmatprep.subr.mxu0 0.0
    %1198 = vmatpush2.msra.mxu0 0.0
    %1199 = vmatprep.subr.mxu0 0.0
    %1200 = vmatpush2.msra.mxu0 0.0
    %1201 = vmatprep.subr.mxu0 0.0
    %1202 = vmatpush2.msra.mxu0 0.0
    %1203 = vmatprep.subr.mxu0 0.0
    %1204 = vmatpush2.msra.mxu0 0.0
    %1205 = vmatprep.subr.mxu0 0.0
    %1206 = vmatpush2.msra.mxu0 0.0
    %1207 = vmatprep.subr.mxu0 0.0
    %1208 = vmatpush2.msra.mxu0 0.0
    %1209 = vmatprep.subr.mxu0 0.0
    %1210 = vmatpush2.msra.mxu0 0.0
    %1211 = vmatprep.subr.mxu0 0.0
    %1212 = vmatpush2.msra.mxu0 0.0
    %1213 = vmatprep.subr.mxu0 0.0
    %1214 = vmatpush2.msra.mxu0 0.0
    %1215 = vmatprep.subr.mxu0 0.0
    %1216 = vmatpush2.msra.mxu0 0.0
    %1217 = vmatprep.subr.mxu0 0.0
    %1218 = vmatpush2.msra.mxu0 0.0
    %1219 = vmatprep.mubr.f32.mxu0 0.0
    %1220 = vmatmul.mubr.f32.gmra.mxu0 %v1153
    %v1221 = vpop.f32.mrf.mxu0
    %v1222 = vadd.f32 %v249, %v1221
    %v1223 = vpop.f32.mrf.mxu0
    %1224 = vdwg.mxu0
    %v1225 = vmul.f32 %v1222, 0.5
    %v1226 = vtanh.pop %v1225
    %v1227 = vadd.f32 %v1226, 1.0
    %v1228 = vmul.f32 %v1227, 0.5
    %v1229 = vtanh.pop %v1222
    %v1230 = vmul.f32 %v1228, %v1059
    %1232 = vrot.lane.b32.xlu0 %v1229, 64
    %v1233 = vpop.permute.xlu0 %1232
    %v1235 = vmul.f32 %v1228, %v1233
    %1237 = vrot.lane.b32.xlu0 %v1235, 32
    %v1238 = vpop.permute.xlu0 %1237
    %v1240 = vadd.f32 %v1230, %v1238
    %v1241 = vtanh.pop %v1240
    %1243 = vrot.lane.b32.xlu0 %v1241, 64
    %v1244 = vpop.permute.xlu0 %1243
    %v1246 = vmul.f32 %v1228, %v1244
    %1248 = vrot.lane.b32.xlu0 %v1246, 32
    %v1249 = vpop.permute.xlu0 %1248
    %s1251 = scalar_lea.vmem [#allocation8], 10
    %1252 = vst.msk [vmem:[%s1251] sm:$0x3] %vm350, %v1249
    %1254 = vrot.lane.b32.xlu0 %v1240, 96
    %v1255 = vpop.permute.xlu0 %1254
    %v1256 = vsel %vm170, %v1255, 0
    %1258 = vmatprep.subr.mxu0 0.0
    %1259 = vmatpush1.msra.mxu0 0.0
    %1260 = vmatprep.subr.mxu0 0.0
    %1261 = vmatpush1.msra.mxu0 0.0
    %1262 = vmatprep.subr.mxu0 0.0
    %1263 = vmatpush1.msra.mxu0 0.0
    %1264 = vmatprep.subr.mxu0 0.0
    %1265 = vmatpush1.msra.mxu0 0.0
    %1266 = vmatprep.subr.mxu0 0.0
    %1267 = vmatpush1.msra.mxu0 0.0
    %1268 = vmatprep.subr.mxu0 0.0
    %1269 = vmatpush1.msra.mxu0 0.0
    %1270 = vmatprep.subr.mxu0 0.0
    %1271 = vmatpush1.msra.mxu0 0.0
    %1272 = vmatprep.subr.mxu0 0.0
    %1273 = vmatpush1.msra.mxu0 0.0
    %1274 = vmatprep.subr.mxu0 0.0
    %1275 = vmatpush1.msra.mxu0 0.0
    %1276 = vmatprep.subr.mxu0 0.0
    %1277 = vmatpush1.msra.mxu0 0.0
    %1278 = vmatprep.subr.mxu0 0.0
    %1279 = vmatpush1.msra.mxu0 0.0
    %1280 = vmatprep.subr.mxu0 0.0
    %1281 = vmatpush1.msra.mxu0 0.0
    %1282 = vmatprep.subr.mxu0 0.0
    %1283 = vmatpush1.msra.mxu0 %v68
    %1284 = vmatprep.subr.mxu0 0.0
    %1285 = vmatpush1.msra.mxu0 %v67
    %1286 = vmatprep.subr.mxu0 0.0
    %1287 = vmatpush1.msra.mxu0 %v66
    %1288 = vmatprep.subr.mxu0 0.0
    %1289 = vmatpush1.msra.mxu0 %v65
    %1290 = vmatprep.subr.mxu0 0.0
    %1291 = vmatpush2.msra.mxu0 0.0
    %1292 = vmatprep.subr.mxu0 0.0
    %1293 = vmatpush2.msra.mxu0 0.0
    %1294 = vmatprep.subr.mxu0 0.0
    %1295 = vmatpush2.msra.mxu0 0.0
    %1296 = vmatprep.subr.mxu0 0.0
    %1297 = vmatpush2.msra.mxu0 0.0
    %1298 = vmatprep.subr.mxu0 0.0
    %1299 = vmatpush2.msra.mxu0 0.0
    %1300 = vmatprep.subr.mxu0 0.0
    %1301 = vmatpush2.msra.mxu0 0.0
    %1302 = vmatprep.subr.mxu0 0.0
    %1303 = vmatpush2.msra.mxu0 0.0
    %1304 = vmatprep.subr.mxu0 0.0
    %1305 = vmatpush2.msra.mxu0 0.0
    %1306 = vmatprep.subr.mxu0 0.0
    %1307 = vmatpush2.msra.mxu0 0.0
    %1308 = vmatprep.subr.mxu0 0.0
    %1309 = vmatpush2.msra.mxu0 0.0
    %1310 = vmatprep.subr.mxu0 0.0
    %1311 = vmatpush2.msra.mxu0 0.0
    %1312 = vmatprep.subr.mxu0 0.0
    %1313 = vmatpush2.msra.mxu0 0.0
    %1314 = vmatprep.subr.mxu0 0.0
    %1315 = vmatpush2.msra.mxu0 0.0
    %1316 = vmatprep.subr.mxu0 0.0
    %1317 = vmatpush2.msra.mxu0 0.0
    %1318 = vmatprep.subr.mxu0 0.0
    %1319 = vmatpush2.msra.mxu0 0.0
    %1320 = vmatprep.subr.mxu0 0.0
    %1321 = vmatpush2.msra.mxu0 0.0
    %1322 = vmatprep.mubr.f32.mxu0 0.0
    %1323 = vmatmul.mubr.f32.gmra.mxu0 %v1256
    %v1324 = vpop.f32.mrf.mxu0
    %v1325 = vadd.f32 0.0, %v1324
    %v1326 = vpop.f32.mrf.mxu0
    %1327 = vdwg.mxu0
    %v1329 = vrot.slane %v1325, 4
    %v1331 = vadd.f32 %v167, %v1329
    %v1333 = vrot.slane %v1331, 4
    %v1334 = vsel %vm170, %v1333, 0
    %1336 = vmatprep.subr.mxu0 0.0
    %1337 = vmatpush1.msra.mxu0 0.0
    %1338 = vmatprep.subr.mxu0 0.0
    %1339 = vmatpush1.msra.mxu0 0.0
    %1340 = vmatprep.subr.mxu0 0.0
    %1341 = vmatpush1.msra.mxu0 0.0
    %1342 = vmatprep.subr.mxu0 0.0
    %1343 = vmatpush1.msra.mxu0 0.0
    %1344 = vmatprep.subr.mxu0 0.0
    %1345 = vmatpush1.msra.mxu0 0.0
    %1346 = vmatprep.subr.mxu0 0.0
    %1347 = vmatpush1.msra.mxu0 0.0
    %1348 = vmatprep.subr.mxu0 0.0
    %1349 = vmatpush1.msra.mxu0 0.0
    %1350 = vmatprep.subr.mxu0 0.0
    %1351 = vmatpush1.msra.mxu0 0.0
    %1352 = vmatprep.subr.mxu0 0.0
    %1353 = vmatpush1.msra.mxu0 0.0
    %1354 = vmatprep.subr.mxu0 0.0
    %1355 = vmatpush1.msra.mxu0 0.0
    %1356 = vmatprep.subr.mxu0 0.0
    %1357 = vmatpush1.msra.mxu0 0.0
    %1358 = vmatprep.subr.mxu0 0.0
    %1359 = vmatpush1.msra.mxu0 0.0
    %1360 = vmatprep.subr.mxu0 0.0
    %1361 = vmatpush1.msra.mxu0 %v72
    %1362 = vmatprep.subr.mxu0 0.0
    %1363 = vmatpush1.msra.mxu0 %v71
    %1364 = vmatprep.subr.mxu0 0.0
    %1365 = vmatpush1.msra.mxu0 %v70
    %1366 = vmatprep.subr.mxu0 0.0
    %1367 = vmatpush1.msra.mxu0 %v69
    %1368 = vmatprep.subr.mxu0 0.0
    %1369 = vmatpush2.msra.mxu0 0.0
    %1370 = vmatprep.subr.mxu0 0.0
    %1371 = vmatpush2.msra.mxu0 0.0
    %1372 = vmatprep.subr.mxu0 0.0
    %1373 = vmatpush2.msra.mxu0 0.0
    %1374 = vmatprep.subr.mxu0 0.0
    %1375 = vmatpush2.msra.mxu0 0.0
    %1376 = vmatprep.subr.mxu0 0.0
    %1377 = vmatpush2.msra.mxu0 0.0
    %1378 = vmatprep.subr.mxu0 0.0
    %1379 = vmatpush2.msra.mxu0 0.0
    %1380 = vmatprep.subr.mxu0 0.0
    %1381 = vmatpush2.msra.mxu0 0.0
    %1382 = vmatprep.subr.mxu0 0.0
    %1383 = vmatpush2.msra.mxu0 0.0
    %1384 = vmatprep.subr.mxu0 0.0
    %1385 = vmatpush2.msra.mxu0 0.0
    %1386 = vmatprep.subr.mxu0 0.0
    %1387 = vmatpush2.msra.mxu0 0.0
    %1388 = vmatprep.subr.mxu0 0.0
    %1389 = vmatpush2.msra.mxu0 0.0
    %1390 = vmatprep.subr.mxu0 0.0
    %1391 = vmatpush2.msra.mxu0 0.0
    %1392 = vmatprep.subr.mxu0 0.0
    %1393 = vmatpush2.msra.mxu0 0.0
    %1394 = vmatprep.subr.mxu0 0.0
    %1395 = vmatpush2.msra.mxu0 0.0
    %1396 = vmatprep.subr.mxu0 0.0
    %1397 = vmatpush2.msra.mxu0 0.0
    %1398 = vmatprep.subr.mxu0 0.0
    %1399 = vmatpush2.msra.mxu0 0.0
    %1400 = vmatprep.mubr.f32.mxu0 0.0
    %1401 = vmatmul.mubr.f32.gmra.mxu0 %v1334
    %v1402 = vpop.f32.mrf.mxu0
    %v1403 = vadd.f32 %v249, %v1402
    %v1404 = vpop.f32.mrf.mxu0
    %1405 = vdwg.mxu0
    %v1406 = vmul.f32 %v1403, 0.5
    %v1407 = vtanh.pop %v1406
    %v1408 = vadd.f32 %v1407, 1.0
    %v1409 = vmul.f32 %v1408, 0.5
    %v1410 = vtanh.pop %v1403
    %v1411 = vmul.f32 %v1409, %v1240
    %1413 = vrot.lane.b32.xlu0 %v1410, 64
    %v1414 = vpop.permute.xlu0 %1413
    %v1416 = vmul.f32 %v1409, %v1414
    %1418 = vrot.lane.b32.xlu0 %v1416, 32
    %v1419 = vpop.permute.xlu0 %1418
    %v1421 = vadd.f32 %v1411, %v1419
    %v1422 = vtanh.pop %v1421
    %1424 = vrot.lane.b32.xlu0 %v1422, 64
    %v1425 = vpop.permute.xlu0 %1424
    %v1427 = vmul.f32 %v1409, %v1425
    %1429 = vrot.lane.b32.xlu0 %v1427, 32
    %v1430 = vpop.permute.xlu0 %1429
    %s1432 = scalar_lea.vmem [#allocation8], 12
    %1433 = vst.msk [vmem:[%s1432] sm:$0x3] %vm350, %v1430
    %1435 = vrot.lane.b32.xlu0 %v1421, 96
    %v1436 = vpop.permute.xlu0 %1435
    %v1437 = vsel %vm170, %v1436, 0
    %1439 = vmatprep.subr.mxu0 0.0
    %1440 = vmatpush1.msra.mxu0 0.0
    %1441 = vmatprep.subr.mxu0 0.0
    %1442 = vmatpush1.msra.mxu0 0.0
    %1443 = vmatprep.subr.mxu0 0.0
    %1444 = vmatpush1.msra.mxu0 0.0
    %1445 = vmatprep.subr.mxu0 0.0
    %1446 = vmatpush1.msra.mxu0 0.0
    %1447 = vmatprep.subr.mxu0 0.0
    %1448 = vmatpush1.msra.mxu0 0.0
    %1449 = vmatprep.subr.mxu0 0.0
    %1450 = vmatpush1.msra.mxu0 0.0
    %1451 = vmatprep.subr.mxu0 0.0
    %1452 = vmatpush1.msra.mxu0 0.0
    %1453 = vmatprep.subr.mxu0 0.0
    %1454 = vmatpush1.msra.mxu0 0.0
    %1455 = vmatprep.subr.mxu0 0.0
    %1456 = vmatpush1.msra.mxu0 0.0
    %1457 = vmatprep.subr.mxu0 0.0
    %1458 = vmatpush1.msra.mxu0 0.0
    %1459 = vmatprep.subr.mxu0 0.0
    %1460 = vmatpush1.msra.mxu0 0.0
    %1461 = vmatprep.subr.mxu0 0.0
    %1462 = vmatpush1.msra.mxu0 0.0
    %1463 = vmatprep.subr.mxu0 0.0
    %1464 = vmatpush1.msra.mxu0 %v68
    %1465 = vmatprep.subr.mxu0 0.0
    %1466 = vmatpush1.msra.mxu0 %v67
    %1467 = vmatprep.subr.mxu0 0.0
    %1468 = vmatpush1.msra.mxu0 %v66
    %1469 = vmatprep.subr.mxu0 0.0
    %1470 = vmatpush1.msra.mxu0 %v65
    %1471 = vmatprep.subr.mxu0 0.0
    %1472 = vmatpush2.msra.mxu0 0.0
    %1473 = vmatprep.subr.mxu0 0.0
    %1474 = vmatpush2.msra.mxu0 0.0
    %1475 = vmatprep.subr.mxu0 0.0
    %1476 = vmatpush2.msra.mxu0 0.0
    %1477 = vmatprep.subr.mxu0 0.0
    %1478 = vmatpush2.msra.mxu0 0.0
    %1479 = vmatprep.subr.mxu0 0.0
    %1480 = vmatpush2.msra.mxu0 0.0
    %1481 = vmatprep.subr.mxu0 0.0
    %1482 = vmatpush2.msra.mxu0 0.0
    %1483 = vmatprep.subr.mxu0 0.0
    %1484 = vmatpush2.msra.mxu0 0.0
    %1485 = vmatprep.subr.mxu0 0.0
    %1486 = vmatpush2.msra.mxu0 0.0
    %1487 = vmatprep.subr.mxu0 0.0
    %1488 = vmatpush2.msra.mxu0 0.0
    %1489 = vmatprep.subr.mxu0 0.0
    %1490 = vmatpush2.msra.mxu0 0.0
    %1491 = vmatprep.subr.mxu0 0.0
    %1492 = vmatpush2.msra.mxu0 0.0
    %1493 = vmatprep.subr.mxu0 0.0
    %1494 = vmatpush2.msra.mxu0 0.0
    %1495 = vmatprep.subr.mxu0 0.0
    %1496 = vmatpush2.msra.mxu0 0.0
    %1497 = vmatprep.subr.mxu0 0.0
    %1498 = vmatpush2.msra.mxu0 0.0
    %1499 = vmatprep.subr.mxu0 0.0
    %1500 = vmatpush2.msra.mxu0 0.0
    %1501 = vmatprep.subr.mxu0 0.0
    %1502 = vmatpush2.msra.mxu0 0.0
    %1503 = vmatprep.mubr.f32.mxu0 0.0
    %1504 = vmatmul.mubr.f32.gmra.mxu0 %v1437
    %v1505 = vpop.f32.mrf.mxu0
    %v1506 = vadd.f32 0.0, %v1505
    %v1507 = vpop.f32.mrf.mxu0
    %1508 = vdwg.mxu0
    %v1510 = vrot.slane %v1506, 2
    %v1512 = vadd.f32 %v167, %v1510
    %v1514 = vrot.slane %v1512, 6
    %v1515 = vsel %vm170, %v1514, 0
    %1517 = vmatprep.subr.mxu0 0.0
    %1518 = vmatpush1.msra.mxu0 0.0
    %1519 = vmatprep.subr.mxu0 0.0
    %1520 = vmatpush1.msra.mxu0 0.0
    %1521 = vmatprep.subr.mxu0 0.0
    %1522 = vmatpush1.msra.mxu0 0.0
    %1523 = vmatprep.subr.mxu0 0.0
    %1524 = vmatpush1.msra.mxu0 0.0
    %1525 = vmatprep.subr.mxu0 0.0
    %1526 = vmatpush1.msra.mxu0 0.0
    %1527 = vmatprep.subr.mxu0 0.0
    %1528 = vmatpush1.msra.mxu0 0.0
    %1529 = vmatprep.subr.mxu0 0.0
    %1530 = vmatpush1.msra.mxu0 0.0
    %1531 = vmatprep.subr.mxu0 0.0
    %1532 = vmatpush1.msra.mxu0 0.0
    %1533 = vmatprep.subr.mxu0 0.0
    %1534 = vmatpush1.msra.mxu0 0.0
    %1535 = vmatprep.subr.mxu0 0.0
    %1536 = vmatpush1.msra.mxu0 0.0
    %1537 = vmatprep.subr.mxu0 0.0
    %1538 = vmatpush1.msra.mxu0 0.0
    %1539 = vmatprep.subr.mxu0 0.0
    %1540 = vmatpush1.msra.mxu0 0.0
    %1541 = vmatprep.subr.mxu0 0.0
    %1542 = vmatpush1.msra.mxu0 %v72
    %1543 = vmatprep.subr.mxu0 0.0
    %1544 = vmatpush1.msra.mxu0 %v71
    %1545 = vmatprep.subr.mxu0 0.0
    %1546 = vmatpush1.msra.mxu0 %v70
    %1547 = vmatprep.subr.mxu0 0.0
    %1548 = vmatpush1.msra.mxu0 %v69
    %1549 = vmatprep.subr.mxu0 0.0
    %1550 = vmatpush2.msra.mxu0 0.0
    %1551 = vmatprep.subr.mxu0 0.0
    %1552 = vmatpush2.msra.mxu0 0.0
    %1553 = vmatprep.subr.mxu0 0.0
    %1554 = vmatpush2.msra.mxu0 0.0
    %1555 = vmatprep.subr.mxu0 0.0
    %1556 = vmatpush2.msra.mxu0 0.0
    %1557 = vmatprep.subr.mxu0 0.0
    %1558 = vmatpush2.msra.mxu0 0.0
    %1559 = vmatprep.subr.mxu0 0.0
    %1560 = vmatpush2.msra.mxu0 0.0
    %1561 = vmatprep.subr.mxu0 0.0
    %1562 = vmatpush2.msra.mxu0 0.0
    %1563 = vmatprep.subr.mxu0 0.0
    %1564 = vmatpush2.msra.mxu0 0.0
    %1565 = vmatprep.subr.mxu0 0.0
    %1566 = vmatpush2.msra.mxu0 0.0
    %1567 = vmatprep.subr.mxu0 0.0
    %1568 = vmatpush2.msra.mxu0 0.0
    %1569 = vmatprep.subr.mxu0 0.0
    %1570 = vmatpush2.msra.mxu0 0.0
    %1571 = vmatprep.subr.mxu0 0.0
    %1572 = vmatpush2.msra.mxu0 0.0
    %1573 = vmatprep.subr.mxu0 0.0
    %1574 = vmatpush2.msra.mxu0 0.0
    %1575 = vmatprep.subr.mxu0 0.0
    %1576 = vmatpush2.msra.mxu0 0.0
    %1577 = vmatprep.subr.mxu0 0.0
    %1578 = vmatpush2.msra.mxu0 0.0
    %1579 = vmatprep.subr.mxu0 0.0
    %1580 = vmatpush2.msra.mxu0 0.0
    %1581 = vmatprep.mubr.f32.mxu0 0.0
    %1582 = vmatmul.mubr.f32.gmra.mxu0 %v1515
    %v1583 = vpop.f32.mrf.mxu0
    %v1584 = vadd.f32 %v249, %v1583
    %v1585 = vpop.f32.mrf.mxu0
    %1586 = vdwg.mxu0
    %v1587 = vmul.f32 %v1584, 0.5
    %v1588 = vtanh.pop %v1587
    %v1589 = vadd.f32 %v1588, 1.0
    %v1590 = vmul.f32 %v1589, 0.5
    %v1591 = vtanh.pop %v1584
    %v1592 = vmul.f32 %v1590, %v1421
    %1594 = vrot.lane.b32.xlu0 %v1591, 64
    %v1595 = vpop.permute.xlu0 %1594
    %v1597 = vmul.f32 %v1590, %v1595
    %1599 = vrot.lane.b32.xlu0 %v1597, 32
    %v1600 = vpop.permute.xlu0 %1599
    %v1602 = vadd.f32 %v1592, %v1600
    %v1603 = vtanh.pop %v1602
    %1605 = vrot.lane.b32.xlu0 %v1603, 64
    %v1606 = vpop.permute.xlu0 %1605
    %v1608 = vmul.f32 %v1590, %v1606
    %1610 = vrot.lane.b32.xlu0 %v1608, 32
    %v1611 = vpop.permute.xlu0 %1610
    %s1613 = scalar_lea.vmem [#allocation8], 14
    %1614 = vst.msk [vmem:[%s1613] sm:$0x3] %vm350, %v1611
    %1615 = vst.msk [vmem:[#allocation9] sm:$0x3] %vm350, %v1611
    %1617 = vrot.lane.b32.xlu0 %v1602, 96
    %v1618 = vpop.permute.xlu0 %1617
    %1620 = vst.msk [vmem:[#allocation11] sm:$0x3] %vm350, %v1618
    // Predicated region
    $region38: #{peephole_qlstm.1} parent=1 // pred_check
      _
    $region39: #{peephole_qlstm.1} parent=1 // pred_check_branch
      %1622 = sbr.rel (0) target = $region41
    $region40: #{peephole_qlstm.1} parent=1 // pred_region
      %s1624 = ssub.s32 256, 256
      %1625 = vsyncadd [#allocation4], %s1624
      %s1626 = sshll.u32 [#allocation8], 4
      %s1627 = int_to_ptr.vmem [resolvable:$true] %s1626
      %1632 = dma.vmem_to_hbm [thread:$0]  %s1627, 256, %s6, [#allocation4], 32, 32, 2
    $region41: #{peephole_qlstm.1} parent=1 // pred_fallthru
      _
    // Predicated region
    $region42: #{peephole_qlstm.1} parent=1 // pred_check
      _
    $region43: #{peephole_qlstm.1} parent=1 // pred_check_branch
      %1634 = sbr.rel (0) target = $region45
    $region44: #{peephole_qlstm.1} parent=1 // pred_region
      %s1636 = ssub.s32 32, 32
      %1637 = vsyncadd [#allocation10], %s1636
      %s1639 = sshll.u32 [#allocation9], 4
      %s1640 = int_to_ptr.vmem [resolvable:$true] %s1639
      %1642 = dma.vmem_to_hbm [thread:$0]  %s1640, 32, %s7, [#allocation10]
    $region45: #{peephole_qlstm.1} parent=1 // pred_fallthru
      _
    // Predicated region
    $region46: #{peephole_qlstm.1} parent=1 // pred_check
      _
    $region47: #{peephole_qlstm.1} parent=1 // pred_check_branch
      %1644 = sbr.rel (0) target = $region49
    $region48: #{peephole_qlstm.1} parent=1 // pred_region
      %s1646 = ssub.s32 32, 32
      %1647 = vsyncadd [#allocation10], %s1646
      %s1649 = sshll.u32 [#allocation11], 4
      %s1650 = int_to_ptr.vmem [resolvable:$true] %s1649
      %1652 = dma.vmem_to_hbm [thread:$0]  %s1650, 32, %s8, [#allocation10]
    $region49: #{peephole_qlstm.1} parent=1 // pred_fallthru
      _
    // Predicated region
    $region50: #{peephole_qlstm.1} parent=1 // pred_check
      _
    $region51: #{peephole_qlstm.1} parent=1 // pred_check_branch
      %1654 = sbr.rel (0) target = $region53
    $region52: #{peephole_qlstm.1} parent=1 // pred_region
      %1655 = dma.done [#allocation4], 256
    $region53: #{peephole_qlstm.1} parent=1 // pred_fallthru
      _
    // Predicated region
    $region54: #{peephole_qlstm.1} parent=1 // pred_check
      _
    $region55: #{peephole_qlstm.1} parent=1 // pred_check_branch
      %1657 = sbr.rel (0) target = $region57
    $region56: #{peephole_qlstm.1} parent=1 // pred_region
      %1658 = dma.done [#allocation10], 32
    $region57: #{peephole_qlstm.1} parent=1 // pred_fallthru
      _
    // Predicated region
    $region58: #{peephole_qlstm.1} parent=1 // pred_check
      _
    $region59: #{peephole_qlstm.1} parent=1 // pred_check_branch
      %1660 = sbr.rel (0) target = $region61
    $region60: #{peephole_qlstm.1} parent=1 // pred_region
      %1661 = dma.done [#allocation10], 32
    $region61: #{peephole_qlstm.1} parent=1 // pred_fallthru
      _
    %1662 = vsyncpa [#allocation3], 1
    %1663 = vsyncpa [#allocation6], 1
    %1664 = vsyncpa [#allocation4], 1
    %1665 = vsyncpa [#allocation10], 1

</llo_original>
